<compile_context>
chip_gen: v7x
topology: tpu7x:2x2x1
jax: 0.10.0
libtpu: 0.0.40
codegen_flags: <defaults>
</compile_context>

<pallas_src>
import functools

import jax
import jax.numpy as jnp
from jax import lax
from jax.experimental import pallas as pl
from jax.experimental.pallas import tpu as pltpu

_VMEM_LIMIT_BYTES = 32 * 1024 * 1024   # leaves headroom even on v7x (64 MiB)


def _pick_tile(dim, target, minimum):
    """Largest tile <= target that evenly divides dim, never below `minimum`;
    if no such tile exists fall back to the full dim (block == array dim is
    always legal for BlockSpec)."""
    if dim <= target:
        return dim
    t = target
    while t >= minimum:
        if dim % t == 0:
            return t
        t //= 2
    # TODO(synk): pad / mask tails instead of full-dim blocks for large odd dims.
    return dim


# ---------------------------------------------------------------------------
# Kernel 1: tiled linear  y = x @ W + b   (K-axis accumulation in f32 VMEM)
# ---------------------------------------------------------------------------
def _matmul_bias_kernel(x_ref, w_ref, b_ref, o_ref, acc_ref):
    @pl.when(pl.program_id(2) == 0)
    def _init():
        acc_ref[...] = jnp.zeros(acc_ref.shape, acc_ref.dtype)

    acc_ref[...] += jnp.dot(x_ref[...], w_ref[...],
                            preferred_element_type=jnp.float32)

    @pl.when(pl.program_id(2) == pl.num_programs(2) - 1)
    def _finalize():
        o_ref[...] = (acc_ref[...] + b_ref[...]).astype(o_ref.dtype)


def linear_pallas(x, w, b, *, out_dtype=None, tm=512, tn=512, tk=512):
    """y = x @ w + b. x/w should be bf16 (MXU-native); b stays f32 and is
    added to the f32 accumulator before the final cast."""
    M, K = x.shape
    Kw, N = w.shape
    assert K == Kw
    out_dtype = x.dtype if out_dtype is None else out_dtype
    tm = _pick_tile(M, tm, 8)
    tn = _pick_tile(N, tn, 128)
    tk = _pick_tile(K, tk, 128)
    grid = (M // tm, N // tn, K // tk)

    out_bytes = jnp.dtype(out_dtype).itemsize
    return pl.pallas_call(
        _matmul_bias_kernel,
        out_shape=jax.ShapeDtypeStruct((M, N), out_dtype),
        grid_spec=pltpu.PrefetchScalarGridSpec(
            num_scalar_prefetch=0,
            grid=grid,
            in_specs=[
                pl.BlockSpec((tm, tk), lambda i, j, k: (i, k)),
                pl.BlockSpec((tk, tn), lambda i, j, k: (k, j)),
                pl.BlockSpec((1, tn), lambda i, j, k: (0, j)),
            ],
            out_specs=pl.BlockSpec((tm, tn), lambda i, j, k: (i, j)),
            scratch_shapes=[pltpu.VMEM((tm, tn), jnp.float32)],
        ),
        compiler_params=pltpu.CompilerParams(
            dimension_semantics=("parallel", "parallel", "arbitrary"),
            vmem_limit_bytes=_VMEM_LIMIT_BYTES),
        cost_estimate=pl.CostEstimate(
            flops=2 * M * N * K,
            transcendentals=0,
            bytes_accessed=(x.dtype.itemsize * M * K + w.dtype.itemsize * K * N
                            + b.dtype.itemsize * N + out_bytes * M * N)),
    )(x, w, b.reshape(1, N))


# ---------------------------------------------------------------------------
# Kernel 2: flash-style attention with online softmax.
#   q is pre-scaled (head_dim**-0.5 / tau folded into the q projection).
#   Each block may carry `heads_per_block` packed heads so the lane dim of
#   every load/store is >= 128; heads are processed by a static per-head loop.
# ---------------------------------------------------------------------------
def _flash_attn_kernel(q_ref, k_ref, v_ref, o_ref, m_ref, l_ref, acc_ref, *,
                       kv_axis, heads_per_block, head_dim):
    kv = pl.program_id(kv_axis)

    @pl.when(kv == 0)
    def _init():
        m_ref[...] = jnp.full(m_ref.shape, -jnp.inf, m_ref.dtype)
        l_ref[...] = jnp.zeros(l_ref.shape, l_ref.dtype)
        acc_ref[...] = jnp.zeros(acc_ref.shape, acc_ref.dtype)

    q = q_ref[0]          # (tq, P*D) bf16, already scaled
    k = k_ref[0]          # (tk, P*D) bf16
    v = v_ref[0]          # (tk, P*D) bf16

    for h in range(heads_per_block):
        lo, hi = h * head_dim, (h + 1) * head_dim
        qh, kh, vh = q[:, lo:hi], k[:, lo:hi], v[:, lo:hi]

        # Contract last dims directly -> no materialized k.T.
        s = lax.dot_general(qh, kh, (((1,), (1,)), ((), ())),
                            preferred_element_type=jnp.float32)   # (tq, tk) f32

        m_prev = m_ref[h]
        m_new = jnp.maximum(m_prev, jnp.max(s, axis=-1, keepdims=True))
        alpha = jnp.exp(m_prev - m_new)
        p = jnp.exp(s - m_new)
        l_ref[h] = alpha * l_ref[h] + jnp.sum(p, axis=-1, keepdims=True)
        acc_ref[h] = alpha * acc_ref[h] + jnp.dot(
            p.astype(v.dtype), vh, preferred_element_type=jnp.float32)
        m_ref[h] = m_new

    @pl.when(kv == pl.num_programs(kv_axis) - 1)
    def _finalize():
        outs = []
        for h in range(heads_per_block):
            # approx reciprocal (EUP slot); ~1e-3 rel error, fine for inference.
            inv_l = pl.reciprocal(l_ref[h], approx=True)
            outs.append(acc_ref[h] * inv_l)
        merged = outs[0] if heads_per_block == 1 else jnp.concatenate(outs, -1)
        o_ref[0] = merged.astype(o_ref.dtype)


def attention_pallas_heads(qkv, B, T, H, D, *, heads_per_block, tq=256, tk=512):
    """qkv: (B, T, 3*H*D) laid out [q heads | k heads | v heads].

    Heads are sliced zero-copy via BlockSpec index_maps; `heads_per_block`
    heads share one lane-dense block (P*D >= 128)."""
    E = H * D
    S = T
    P = heads_per_block
    G = H // P
    PD = P * D
    tq = _pick_tile(T, tq, 8)
    tk = _pick_tile(S, tk, 128)
    grid = (B, G, T // tq, S // tk)

    q_spec = pl.BlockSpec((1, tq, PD), lambda b, g, qi, ki: (b, qi, g))
    k_spec = pl.BlockSpec((1, tk, PD), lambda b, g, qi, ki: (b, ki, G + g))
    v_spec = pl.BlockSpec((1, tk, PD), lambda b, g, qi, ki: (b, ki, 2 * G + g))
    o_spec = pl.BlockSpec((1, tq, PD), lambda b, g, qi, ki: (b, qi, g))

    kernel = functools.partial(_flash_attn_kernel, kv_axis=3,
                               heads_per_block=P, head_dim=D)
    itemsize = qkv.dtype.itemsize
    return pl.pallas_call(
        kernel,
        out_shape=jax.ShapeDtypeStruct((B, T, E), qkv.dtype),
        grid_spec=pltpu.PrefetchScalarGridSpec(
            num_scalar_prefetch=0,
            grid=grid,
            in_specs=[q_spec, k_spec, v_spec],
            out_specs=o_spec,
            scratch_shapes=[
                pltpu.VMEM((P, tq, 1), jnp.float32),   # running max per head
                pltpu.VMEM((P, tq, 1), jnp.float32),   # running sum per head
                pltpu.VMEM((P, tq, D), jnp.float32),   # output accumulator
            ],
        ),
        compiler_params=pltpu.CompilerParams(
            dimension_semantics=("parallel", "parallel", "parallel",
                                 "arbitrary"),
            vmem_limit_bytes=_VMEM_LIMIT_BYTES),
        cost_estimate=pl.CostEstimate(
            flops=4 * B * H * T * S * D,
            transcendentals=B * H * T * S,
            bytes_accessed=itemsize * (3 * B * T * E + B * T * E)),
    )(qkv, qkv, qkv)


def attention_pallas_folded(qh, kh, vh, *, tq=256, tk=512):
    """Fallback for exotic head_dims: inputs are (B*H, T, D)."""
    BH, T, D = qh.shape
    S = kh.shape[1]
    tq = _pick_tile(T, tq, 8)
    tk = _pick_tile(S, tk, 128)
    grid = (BH, T // tq, S // tk)

    kernel = functools.partial(_flash_attn_kernel, kv_axis=2,
                               heads_per_block=1, head_dim=D)
    itemsize = qh.dtype.itemsize
    return pl.pallas_call(
        kernel,
        out_shape=jax.ShapeDtypeStruct((BH, T, D), qh.dtype),
        grid_spec=pltpu.PrefetchScalarGridSpec(
            num_scalar_prefetch=0,
            grid=grid,
            in_specs=[
                pl.BlockSpec((1, tq, D), lambda i, qi, ki: (i, qi, 0)),
                pl.BlockSpec((1, tk, D), lambda i, qi, ki: (i, ki, 0)),
                pl.BlockSpec((1, tk, D), lambda i, qi, ki: (i, ki, 0)),
            ],
            out_specs=pl.BlockSpec((1, tq, D), lambda i, qi, ki: (i, qi, 0)),
            scratch_shapes=[
                pltpu.VMEM((1, tq, 1), jnp.float32),
                pltpu.VMEM((1, tq, 1), jnp.float32),
                pltpu.VMEM((1, tq, D), jnp.float32),
            ],
        ),
        compiler_params=pltpu.CompilerParams(
            dimension_semantics=("parallel", "parallel", "arbitrary"),
            vmem_limit_bytes=_VMEM_LIMIT_BYTES),
        cost_estimate=pl.CostEstimate(
            flops=4 * BH * T * S * D,
            transcendentals=BH * T * S,
            bytes_accessed=itemsize * (2 * BH * T * D + 2 * BH * S * D)),
    )(qh, kh, vh)


# ---------------------------------------------------------------------------
# BartAttention forward (self-attention branch)
# ---------------------------------------------------------------------------
def prepare_bart_attention_params(params, num_heads, tau=1.0,
                                  compute_dtype=jnp.bfloat16):
    """One-time parameter prep: fuse [Wq*scale | Wk | Wv] and fold
    head_dim**-0.5 / tau into the q projection (in f32, then cast once)."""
    E = params["wq"].shape[0]
    D = E // num_heads
    q_scale = (D ** -0.5) / tau
    w_qkv = jnp.concatenate(
        [params["wq"] * q_scale, params["wk"], params["wv"]],
        axis=1).astype(compute_dtype)
    b_qkv = jnp.concatenate(
        [params["bq"] * q_scale, params["bk"], params["bv"]],
        axis=0).astype(jnp.float32)
    return {
        "w_qkv": w_qkv,
        "b_qkv": b_qkv,
        "wo": params["wo"].astype(compute_dtype),
        "bo": params["bo"].astype(jnp.float32),
    }


def bart_attention_forward(hidden_states, prepared, num_heads):
    B, T, E = hidden_states.shape
    H = num_heads
    D = E // H
    compute_dtype = prepared["w_qkv"].dtype

    x2d = hidden_states.reshape(B * T, E).astype(compute_dtype)
    # Fused QKV projection: x read once; output kept bf16 for the attention
    # kernel's streaming K/V re-reads and the out-projection read.
    qkv = linear_pallas(x2d, prepared["w_qkv"], prepared["b_qkv"],
                        out_dtype=compute_dtype)            # (B*T, 3E)

    if D % 128 == 0:
        heads_per_block = 1                   # head blocks already lane-dense
    elif 128 % D == 0 and H % (128 // D) == 0:
        heads_per_block = 128 // D            # pack heads -> 128-wide blocks
    else:
        heads_per_block = 0

    if heads_per_block:
        attn2d = attention_pallas_heads(
            qkv.reshape(B, T, 3 * E), B, T, H, D,
            heads_per_block=heads_per_block).reshape(B * T, E)
    else:
        # TODO(synk): pad head_dim to a lane-friendly size instead of this
        # transpose-heavy fallback for exotic (head_dim, num_heads) combos.
        q, k, v = qkv[:, :E], qkv[:, E:2 * E], qkv[:, 2 * E:]

        def to_heads(t):  # (B*T, E) -> (B*H, T, D)
            return t.reshape(B, T, H, D).transpose(0, 2, 1, 3).reshape(B * H, T, D)

        attn = attention_pallas_folded(to_heads(q), to_heads(k), to_heads(v))
        attn2d = attn.reshape(B, H, T, D).transpose(0, 2, 1, 3).reshape(B * T, E)

    out = linear_pallas(attn2d, prepared["wo"], prepared["bo"],
                        out_dtype=hidden_states.dtype)
    return out.reshape(B, T, E)
    # TODO(synk): cross-attention / kv-cache / attention_mask / layer_head_mask
    # / dropout / output_attentions / input_type branches are not implemented.


# ---------------------------------------------------------------------------
# Pure-JAX reference (follows the PyTorch module literally, f32)
# ---------------------------------------------------------------------------
def bart_attention_ref(hidden_states, params, num_heads, tau=1.0):
    B, T, E = hidden_states.shape
    H = num_heads
    D = E // H
    scaling = D ** (-0.5)
    q = (hidden_states @ params["wq"] + params["bq"]) * scaling
    k = hidden_states @ params["wk"] + params["bk"]
    v = hidden_states @ params["wv"] + params["bv"]

    def to_heads(t):
        return t.reshape(B, T, H, D).transpose(0, 2, 1, 3)

    qh, kh, vh = to_heads(q), to_heads(k), to_heads(v)
    scores = jnp.einsum("bhtd,bhsd->bhts", qh, kh) / tau
    probs = jax.nn.softmax(scores, axis=-1)
    attn = jnp.einsum("bhts,bhsd->bhtd", probs, vh)
    attn = attn.transpose(0, 2, 1, 3).reshape(B, T, E)
    return attn @ params["wo"] + params["bo"]


def _make_params(key, E):
    ks = jax.random.split(key, 8)
    init = lambda k, shape: jax.random.normal(k, shape, jnp.float32) * 0.05
    return {
        "wq": init(ks[0], (E, E)), "bq": init(ks[1], (E,)),
        "wk": init(ks[2], (E, E)), "bk": init(ks[3], (E,)),
        "wv": init(ks[4], (E, E)), "bv": init(ks[5], (E,)),
        "wo": init(ks[6], (E, E)), "bo": init(ks[7], (E,)),
    }


if __name__ == "__main__":
    key = jax.random.PRNGKey(0)
    kp, kh = jax.random.split(key)

    B, T, E = 2, 128, 256
    params = _make_params(kp, E)
    hidden = jax.random.normal(kh, (B, T, E), jnp.float32)

    def check(num_heads, tau, name):
        prepared = prepare_bart_attention_params(params, num_heads, tau=tau)
        out = jax.block_until_ready(
            bart_attention_forward(hidden, prepared, num_heads))
        ref = bart_attention_ref(hidden, params, num_heads, tau=tau)
        assert out.shape == ref.shape
        err = float(jnp.max(jnp.abs(out.astype(jnp.float32) - ref)))
        scale = float(jnp.max(jnp.abs(ref))) + 1e-6
        # bf16 MXU operands + approx reciprocal -> allow ~3% of output scale.
        assert err <= 0.03 * scale + 1e-3, f"{name}: err={err}, scale={scale}"

    # Case 1: head_dim = 128 -> one lane-aligned head per block (P = 1).
    check(num_heads=2, tau=1.0, name="lane-aligned heads (D=128)")
    # Case 2: head_dim = 64, tau != 1 -> 2 heads packed per 128-wide block.
    check(num_heads=4, tau=2.0, name="packed heads (D=64, P=2)")

    print("KERNEL_OK")
</pallas_src>

<mosaic_0001>
module attributes {stable_mosaic.version = 11 : i64} {
  func.func @_matmul_bias_kernel(%arg0: i32, %arg1: i32, %arg2: i32, %arg3: memref<256x256xbf16, #tpu.memory_space<vmem>>, %arg4: memref<256x256xbf16, #tpu.memory_space<vmem>>, %arg5: memref<1x256xf32, #tpu.memory_space<vmem>>, %arg6: memref<256x256xbf16, #tpu.memory_space<vmem>>, %arg7: memref<256x256xf32, #tpu.memory_space<vmem>>) attributes {dimension_semantics = [#tpu.dimension_semantics<parallel>, #tpu.dimension_semantics<parallel>, #tpu.dimension_semantics<arbitrary>], iteration_bounds = array<i64: 1, 3, 1>, scalar_prefetch = 0 : i64, scratch_operands = 1 : i64, tpu.core_type = #tpu.core_type<tc>, window_params = [{transform_indices = @transform_0, window_bounds = array<i64: 256, 256>}, {transform_indices = @transform_1, window_bounds = array<i64: 256, 256>}, {transform_indices = @transform_2, window_bounds = array<i64: 1, 256>}, {transform_indices = @transform_3, window_bounds = array<i64: 256, 256>}]} {
    %c0_i32 = arith.constant 0 : i32
    %0 = arith.cmpi eq, %arg2, %c0_i32 : i32
    %1 = arith.extui %0 : i1 to i32
    %c0_i32_0 = arith.constant 0 : i32
    %2 = arith.cmpi ne, %1, %c0_i32_0 : i32
    scf.if %2 {
      %cst_10 = arith.constant 0.000000e+00 : f32
      %12 = vector.broadcast %cst_10 : f32 to vector<256x256xf32>
      %c0_11 = arith.constant 0 : index
      %c0_12 = arith.constant 0 : index
      %13 = vector.load %arg7[%c0_11, %c0_12] : memref<256x256xf32, #tpu.memory_space<vmem>>, vector<256x256xf32>
      tpu.vector_store %arg7[%c0_11, %c0_12], %12 {strides = array<i32>} : memref<256x256xf32, #tpu.memory_space<vmem>>, vector<256x256xf32>,
    } else {
    }
    %c0 = arith.constant 0 : index
    %c0_1 = arith.constant 0 : index
    %3 = vector.load %arg7[%c0, %c0_1] : memref<256x256xf32, #tpu.memory_space<vmem>>, vector<256x256xf32>
    %c0_2 = arith.constant 0 : index
    %c0_3 = arith.constant 0 : index
    %4 = vector.load %arg3[%c0_2, %c0_3] : memref<256x256xbf16, #tpu.memory_space<vmem>>, vector<256x256xbf16>
    %c0_4 = arith.constant 0 : index
    %c0_5 = arith.constant 0 : index
    %5 = vector.load %arg4[%c0_4, %c0_5] : memref<256x256xbf16, #tpu.memory_space<vmem>>, vector<256x256xbf16>
    %cst = arith.constant dense<0.000000e+00> : vector<256x256xf32>
    %6 = tpu.matmul %4, %5, %cst {dimension_numbers = #tpu.dot_dimension_numbers<[1], [0], [0], [1], [0, 0, 1, 1], [], []>} : vector<256x256xbf16>, vector<256x256xbf16>, vector<256x256xf32> -> vector<256x256xf32>
    %7 = arith.addf %3, %6 : vector<256x256xf32>
    %c0_6 = arith.constant 0 : index
    %c0_7 = arith.constant 0 : index
    %8 = vector.load %arg7[%c0_6, %c0_7] : memref<256x256xf32, #tpu.memory_space<vmem>>, vector<256x256xf32>
    tpu.vector_store %arg7[%c0_6, %c0_7], %7 {strides = array<i32>} : memref<256x256xf32, #tpu.memory_space<vmem>>, vector<256x256xf32>,
    %c0_i32_8 = arith.constant 0 : i32
    %9 = arith.cmpi eq, %arg2, %c0_i32_8 : i32
    %10 = arith.extui %9 : i1 to i32
    %c0_i32_9 = arith.constant 0 : i32
    %11 = arith.cmpi ne, %10, %c0_i32_9 : i32
    scf.if %11 {
      %c0_10 = arith.constant 0 : index
      %c0_11 = arith.constant 0 : index
      %12 = vector.load %arg7[%c0_10, %c0_11] : memref<256x256xf32, #tpu.memory_space<vmem>>, vector<256x256xf32>
      %c0_12 = arith.constant 0 : index
      %c0_13 = arith.constant 0 : index
      %13 = vector.load %arg5[%c0_12, %c0_13] : memref<1x256xf32, #tpu.memory_space<vmem>>, vector<1x256xf32>
      %14 = vector.broadcast %13 : vector<1x256xf32> to vector<256x256xf32>
      %15 = arith.addf %12, %14 : vector<256x256xf32>
      %16 = arith.truncf %15 : vector<256x256xf32> to vector<256x256xbf16>
      %c0_14 = arith.constant 0 : index
      %c0_15 = arith.constant 0 : index
      %17 = vector.load %arg6[%c0_14, %c0_15] : memref<256x256xbf16, #tpu.memory_space<vmem>>, vector<256x256xbf16>
      tpu.vector_store %arg6[%c0_14, %c0_15], %16 {strides = array<i32>} : memref<256x256xbf16, #tpu.memory_space<vmem>>, vector<256x256xbf16>,
    } else {
    }
    return
  }
  func.func @transform_0(%arg0: i32, %arg1: i32, %arg2: i32) -> (i32, i32) {
    %c0_i32 = arith.constant 0 : i32
    return %arg0, %arg2 : i32, i32
  }
  func.func @transform_1(%arg0: i32, %arg1: i32, %arg2: i32) -> (i32, i32) {
    %c0_i32 = arith.constant 0 : i32
    return %arg2, %arg1 : i32, i32
  }
  func.func @transform_2(%arg0: i32, %arg1: i32, %arg2: i32) -> (i32, i32) {
    %c0_i32 = arith.constant 0 : i32
    %c0_i32_0 = arith.constant 0 : i32
    return %c0_i32, %arg1 : i32, i32
  }
  func.func @transform_3(%arg0: i32, %arg1: i32, %arg2: i32) -> (i32, i32) {
    %c0_i32 = arith.constant 0 : i32
    return %arg0, %arg1 : i32, i32
  }
}

</mosaic_0001>

<llo_original>
// kernel: tpu_custom_call.1
$region0: #{tpu_custom_call.1}
  #allocation0 [shape = 'u32[]', space=smem, size = 0x4, offset = 0x4, fixed_abs, tag = 'smem constant byte address 0x4 - core index']
  #allocation1 [shape = 'u32[144,128]{1,0:T(1,128)}', space=vmem, size = 0x12000, scoped, tag = 'internal scratch']
  #allocation2 [shape = 'f32[256,256]{1,0:T(8,128)}', space=vmem, size = 0x40000, scoped, tag = 'scratch operand']
  %s0 = inlined_call_operand.hbm [shape: bf16[256,256], index: 0, kind: input, shape index: {}]
  %s1 = inlined_call_operand.hbm [shape: bf16[256,768], index: 1, kind: input, shape index: {}]
  %s2 = inlined_call_operand.vmem [shape: f32[1,768], index: 2, kind: input, shape index: {}]
  %s3 = inlined_call_operand.hbm [shape: bf16[256,768], index: 3, kind: output, shape index: {}]
  %s4 = sld [smem:[#allocation0]]
  $region61: #{tpu_custom_call.1} parent=0
    _
  %s6 = ssub.s32 1, %s4
  %s7 = scalar_select 0, %s6, %s4
  $region1: #{tpu_custom_call.1} parent=0
    #allocation3 [shape = 'u8[131072]{0}', space=vmem, size = 0x20000, scoped, tag = 'input window, operand 0, single buffered']
    #allocation4 [shape = 's32[2]{0}', space=sflag, size = 0x8, scoped, tag = 'scoped memory for tpu_custom_call.1']
    #allocation5 [shape = 's32[2]{0}', space=sflag, size = 0x8, scoped, tag = 'scoped memory for tpu_custom_call.1']
    #allocation6 [shape = 'u8[262144]{0}', space=vmem, size = 0x40000, scoped, tag = 'input window, operand 1']
    #allocation7 [shape = 's32[2]{0}', space=sflag, size = 0x8, scoped, tag = 'scoped memory for tpu_custom_call.1']
    #allocation8 [shape = 'u8[262144]{0}', space=vmem, size = 0x40000, scoped, tag = 'output window, operand 0']
    %8 = vsyncpa [#allocation4], 0
    %9 = vsyncpa [#allocation7], 0
    %s10 = scalar_lea.sflag [#allocation7], 1
    %11 = vsyncpa %s10, 0
    %12 = vsyncpa [#allocation5], 0
    %s13 = scalar_lea.sflag [#allocation5], 1
    %14 = vsyncpa %s13, 0
    loop: start=0, step=1, limit=5
    $region2: #{tpu_custom_call.1} parent=1 // loop_pre_header
      _
    $region3: #{tpu_custom_call.1} parent=1 // loop_header
      %s16 = sphi 0, %s20
      %p17 = scmp.ge.s32.totalorder %s16, 5
      %s23 = sphi 0, %s42
      %s24 = sphi 0, %s38
      %s25 = sphi 0, %s34
      %s26 = sphi 0, %s23
      %s27 = sphi 0, %s24
      %s28 = sphi 0, %s25
      %s29 = sphi 0, %s26
      %s30 = sphi 0, %s27
      %s31 = sphi 0, %s28
      %s47 = sphi 0, %s49
      %s50 = sphi 0, %s47
      %s51 = sphi 0, %s50
      %s67 = sphi 0, %s51
      %s75 = sphi 0, %s77
      %s78 = sphi 0, %s75
      %s79 = sphi 0, %s78
      %s95 = sphi 0, %s79
      %s101 = sphi 0, %s103
      %s104 = sphi 0, %s101
      %s105 = sphi 0, %s104
      %s121 = sphi 0, %s105
      %s129 = sphi 0, %s131
      %s132 = sphi 0, %s129
      %s133 = sphi 0, %s132
      %s149 = sphi 0, %s133
    $region4: #{tpu_custom_call.1} parent=1 // loop_header_branch
      %19 = sbr.rel (%p17) target = $region8
    $region5: #{tpu_custom_call.1} parent=1 // loop_body
      %s21 = ssub.s32 %s16, 1
      %s22 = ssub.s32 %s16, 2
      %s32 = sadd.s32 1, %s25
      %p33 = scmp.ge.s32.totalorder %s32, 1
      %s34 = scalar_select %p33, 0, %s32
      %s35 = sadd.s32 1, %s24
      %s36 = scalar_select %p33, %s35, %s24
      %p37 = scmp.ge.s32.totalorder %s36, 3
      %s38 = scalar_select %p37, 0, %s36
      %s39 = sadd.s32 1, %s23
      %s40 = scalar_select %p37, %s39, %s23
      %p41 = scmp.ge.s32.totalorder %s40, 1
      %s42 = scalar_select %p41, 0, %s40
      %s43 = ssub.s32 %s23, %s42
      %s44 = ssub.s32 %s25, %s34
      %s45 = sor.u32 %s43, %s44
      %p46 = scmp.eq.s32.totalorder %s45, 0
      %s48 = sadd.s32 %s47, 1
      %s49 = scalar_select %p46, %s47, %s48
      %p52 = pneg %p46
      %p53 = scmp.eq.s32.totalorder %s16, 2
      %p54 = por %p52, %p53
      %p55 = scmp.ne.s32.totalorder %s47, %s50
      %p56 = scmp.eq.s32.totalorder %s16, 0
      %p57 = por %p55, %p56
      %p58 = scmp.ne.s32.totalorder %s47, %s50
      %p59 = scmp.eq.s32.totalorder %s21, 2
      %p60 = por %p58, %p59
      %p61 = scmp.ne.s32.totalorder %s50, %s51
      %p62 = scmp.eq.s32.totalorder %s21, 0
      %p63 = por %p61, %p62
      %p64 = scmp.ne.s32.totalorder %s50, %s51
      %p65 = scmp.eq.s32.totalorder %s22, 2
      %p66 = por %p64, %p65
      %p68 = scmp.ne.s32.totalorder %s51, %s67
      %p69 = scmp.eq.s32.totalorder %s22, 0
      %p70 = por %p68, %p69
      %s71 = ssub.s32 %s25, %s34
      %s72 = ssub.s32 %s24, %s38
      %s73 = sor.u32 %s71, %s72
      %p74 = scmp.eq.s32.totalorder %s73, 0
      %s76 = sadd.s32 %s75, 1
      %s77 = scalar_select %p74, %s75, %s76
      %p80 = pneg %p74
      %p81 = scmp.eq.s32.totalorder %s16, 2
      %p82 = por %p80, %p81
      %p83 = scmp.ne.s32.totalorder %s75, %s78
      %p84 = scmp.eq.s32.totalorder %s16, 0
      %p85 = por %p83, %p84
      %p86 = scmp.ne.s32.totalorder %s75, %s78
      %p87 = scmp.eq.s32.totalorder %s21, 2
      %p88 = por %p86, %p87
      %p89 = scmp.ne.s32.totalorder %s78, %s79
      %p90 = scmp.eq.s32.totalorder %s21, 0
      %p91 = por %p89, %p90
      %p92 = scmp.ne.s32.totalorder %s78, %s79
      %p93 = scmp.eq.s32.totalorder %s22, 2
      %p94 = por %p92, %p93
      %p96 = scmp.ne.s32.totalorder %s79, %s95
      %p97 = scmp.eq.s32.totalorder %s22, 0
      %p98 = por %p96, %p97
      %s99 = ssub.s32 %s24, %s38
      %p100 = scmp.eq.s32.totalorder %s99, 0
      %s102 = sadd.s32 %s101, 1
      %s103 = scalar_select %p100, %s101, %s102
      %p106 = pneg %p100
      %p107 = scmp.eq.s32.totalorder %s16, 2
      %p108 = por %p106, %p107
      %p109 = scmp.ne.s32.totalorder %s101, %s104
      %p110 = scmp.eq.s32.totalorder %s16, 0
      %p111 = por %p109, %p110
      %p112 = scmp.ne.s32.totalorder %s101, %s104
      %p113 = scmp.eq.s32.totalorder %s21, 2
      %p114 = por %p112, %p113
      %p115 = scmp.ne.s32.totalorder %s104, %s105
      %p116 = scmp.eq.s32.totalorder %s21, 0
      %p117 = por %p115, %p116
      %p118 = scmp.ne.s32.totalorder %s104, %s105
      %p119 = scmp.eq.s32.totalorder %s22, 2
      %p120 = por %p118, %p119
      %p122 = scmp.ne.s32.totalorder %s105, %s121
      %p123 = scmp.eq.s32.totalorder %s22, 0
      %p124 = por %p122, %p123
      %s125 = ssub.s32 %s23, %s42
      %s126 = ssub.s32 %s24, %s38
      %s127 = sor.u32 %s125, %s126
      %p128 = scmp.eq.s32.totalorder %s127, 0
      %s130 = sadd.s32 %s129, 1
      %s131 = scalar_select %p128, %s129, %s130
      %p134 = pneg %p128
      %p135 = scmp.eq.s32.totalorder %s16, 2
      %p136 = por %p134, %p135
      %p137 = scmp.ne.s32.totalorder %s129, %s132
      %p138 = scmp.eq.s32.totalorder %s16, 0
      %p139 = por %p137, %p138
      %p140 = scmp.ne.s32.totalorder %s129, %s132
      %p141 = scmp.eq.s32.totalorder %s21, 2
      %p142 = por %p140, %p141
      %p143 = scmp.ne.s32.totalorder %s132, %s133
      %p144 = scmp.eq.s32.totalorder %s21, 0
      %p145 = por %p143, %p144
      %p146 = scmp.ne.s32.totalorder %s132, %s133
      %p147 = scmp.eq.s32.totalorder %s22, 2
      %p148 = por %p146, %p147
      %p150 = scmp.ne.s32.totalorder %s133, %s149
      %p151 = scmp.eq.s32.totalorder %s22, 0
      %p152 = por %p150, %p151
      %p153 = scmp.le.s32.totalorder 1, %s16
      %p154 = scmp.lt.s32.totalorder %s16, 4
      %p155 = pnand %p153, %p154
      %p156 = pneg %p155
      // Predicated region
      $region9: #{tpu_custom_call.1} parent=5 // pred_check
        _
      $region10: #{tpu_custom_call.1} parent=5 // pred_check_branch
        %158 = sbr.rel (%p155) target = $region12
      $region11: #{tpu_custom_call.1} parent=5 // pred_region
        %s159 = ssub.s32 %s16, 1
        // Predicated region
        $region13: #{tpu_custom_call.1} parent=11 // pred_check
          %p160 = pneg %p63
        $region14: #{tpu_custom_call.1} parent=11 // pred_check_branch
          %162 = sbr.rel (%p160) target = $region16
        $region15: #{tpu_custom_call.1} parent=11 // pred_region
          %s163 = smul.u32 32, %s26
          %s164 = smul.u32 2, %s28
          %s166 = ssub.s32 4096, 4096
          %167 = vsyncadd [#allocation4], %s166
          %s168 = smul.addr %s163, 2
          %s169 = sadd.s32 %s164, %s168
          %s170 = smul.addr %s169, 64
          %s171 = scalar_lea.hbm %s0, %s170
          %s172 = sshll.u32 [#allocation3], 4
          %s173 = int_to_ptr.vmem [resolvable:$true] %s172
          %178 = dma.hbm_to_vmem [thread:$0]  %s171, 4096, %s173, [#allocation4], 128, 128, 8
        $region16: #{tpu_custom_call.1} parent=11 // pred_fallthru
          _
      $region12: #{tpu_custom_call.1} parent=5 // pred_fallthru
        _
      %p179 = scmp.lt.s32.totalorder %s16, 3
      // Predicated region
      $region17: #{tpu_custom_call.1} parent=5 // pred_check
        %p180 = pneg %p179
      $region18: #{tpu_custom_call.1} parent=5 // pred_check_branch
        %182 = sbr.rel (%p180) target = $region20
      $region19: #{tpu_custom_call.1} parent=5 // pred_region
        // Predicated region
        $region21: #{tpu_custom_call.1} parent=19 // pred_check
          %p183 = pneg %p85
        $region22: #{tpu_custom_call.1} parent=19 // pred_check_branch
          %185 = sbr.rel (%p183) target = $region24
        $region23: #{tpu_custom_call.1} parent=19 // pred_region
          %s186 = sand.u32 %s75, 1
          %s187 = scalar_lea.sflag [#allocation7], %s186
          %s188 = sand.u32 %s75, 1
          %s189 = smul.addr %s188, 256
          %s190 = scalar_lea.vmem [#allocation6], %s189
          %s191 = smul.u32 32, %s25
          %s192 = smul.u32 2, %s24
          %s194 = ssub.s32 4096, 4096
          %195 = vsyncadd %s187, %s194
          %s196 = smul.addr %s191, 6
          %s197 = sadd.s32 %s192, %s196
          %s198 = smul.addr %s197, 64
          %s199 = scalar_lea.hbm %s1, %s198
          %s200 = sshll.u32 %s190, 4
          %s201 = int_to_ptr.vmem [resolvable:$true] %s200
          %206 = dma.hbm_to_vmem [thread:$0]  %s199, 4096, %s201, %s187, 384, 128, 8
        $region24: #{tpu_custom_call.1} parent=19 // pred_fallthru
          _
        // Predicated region
        $region25: #{tpu_custom_call.1} parent=19 // pred_check
          %p207 = pneg %p111
        $region26: #{tpu_custom_call.1} parent=19 // pred_check_branch
          %209 = sbr.rel (%p207) target = $region28
        $region27: #{tpu_custom_call.1} parent=19 // pred_region
          %s210 = smul.u32 2, %s24
          %p211 = scmp.lt.s32.totalorder %s210, 5
          %s212 = scalar_select %p211, %s210, 5
          %s213 = scalar_lea.vmem %s2, %s212
          %s214 = smul.u32 2, %s24
        $region28: #{tpu_custom_call.1} parent=19 // pred_fallthru
          _
      $region20: #{tpu_custom_call.1} parent=5 // pred_fallthru
        _
      %p215 = scmp.le.s32.totalorder 1, %s16
      %p216 = scmp.lt.s32.totalorder %s16, 4
      %p217 = pnand %p215, %p216
      %p218 = pneg %p217
      // Predicated region
      $region29: #{tpu_custom_call.1} parent=5 // pred_check
        _
      $region30: #{tpu_custom_call.1} parent=5 // pred_check_branch
        %220 = sbr.rel (%p217) target = $region32
      $region31: #{tpu_custom_call.1} parent=5 // pred_region
        %s221 = ssub.s32 %s16, 1
        // Predicated region
        $region33: #{tpu_custom_call.1} parent=31 // pred_check
          %p222 = pneg %p63
        $region34: #{tpu_custom_call.1} parent=31 // pred_check_branch
          %224 = sbr.rel (%p222) target = $region36
        $region35: #{tpu_custom_call.1} parent=31 // pred_region
          %225 = dma.done [#allocation4], 4096
        $region36: #{tpu_custom_call.1} parent=31 // pred_fallthru
          _
        %s226 = sand.u32 %s78, 1
        %s227 = scalar_lea.sflag [#allocation7], %s226
        %s228 = sand.u32 %s78, 1
        %s229 = smul.addr %s228, 256
        %s230 = scalar_lea.vmem [#allocation6], %s229
        // Predicated region
        $region37: #{tpu_custom_call.1} parent=31 // pred_check
          %p231 = pneg %p91
        $region38: #{tpu_custom_call.1} parent=31 // pred_check_branch
          %233 = sbr.rel (%p231) target = $region40
        $region39: #{tpu_custom_call.1} parent=31 // pred_region
          %234 = dma.done %s227, 4096
        $region40: #{tpu_custom_call.1} parent=31 // pred_fallthru
          _
        %p235 = pneg %p63
        %p236 = pneg %p60
        %s237 = sand.u32 %s78, 1
        %s238 = scalar_lea.sflag [#allocation7], %s237
        %s239 = sand.u32 %s78, 1
        %s240 = smul.addr %s239, 256
        %s241 = scalar_lea.vmem [#allocation6], %s240
        %p242 = pneg %p91
        %p243 = pneg %p88
        %s244 = smul.u32 2, %s27
        %p245 = scmp.lt.s32.totalorder %s244, 5
        %s246 = scalar_select %p245, %s244, 5
        %s247 = scalar_lea.vmem %s2, %s246
        %p248 = pneg %p117
        %p249 = pneg %p114
        %p250 = pneg %p145
        %p251 = pneg %p142
        %s252 = sand.u32 %s132, 1
        %s253 = scalar_lea.sflag [#allocation5], %s252
        %s254 = sand.u32 %s132, 1
        %s255 = smul.addr %s254, 256
        %s256 = scalar_lea.vmem [#allocation8], %s255
        %s257 = smul.u32 32, %s26
        %s258 = smul.u32 2, %s28
        %s259 = smul.u32 32, %s28
        %s260 = smul.u32 2, %s27
        %s261 = smul.u32 2, %s27
        %p262 = scmp.lt.s32.totalorder %s261, 5
        %s263 = scalar_select %p262, %s261, 5
        %s264 = scalar_lea.vmem %s2, %s263
        %s265 = smul.u32 2, %s27
        %s266 = smul.u32 32, %s26
        %s267 = smul.u32 2, %s27
        %p268 = scmp.eq.s32.totalorder %s28, 0
        // Predicated region
        $region41: #{tpu_custom_call.1} parent=31 // pred_check
          %p269 = pneg %p268
        $region42: #{tpu_custom_call.1} parent=31 // pred_check_branch
          %271 = sbr.rel (%p269) target = $region44
        $region43: #{tpu_custom_call.1} parent=31 // pred_region
          %272 = vst [vmem:[#allocation2] sm:$0xff] 0.0
          %273 = vst [vmem:[#allocation2 + $0x8] sm:$0xff] 0.0
          %274 = vst [vmem:[#allocation2 + $0x10] sm:$0xff] 0.0
          %275 = vst [vmem:[#allocation2 + $0x18] sm:$0xff] 0.0
          %276 = vst [vmem:[#allocation2 + $0x20] sm:$0xff] 0.0
          %277 = vst [vmem:[#allocation2 + $0x28] sm:$0xff] 0.0
          %278 = vst [vmem:[#allocation2 + $0x30] sm:$0xff] 0.0
          %279 = vst [vmem:[#allocation2 + $0x38] sm:$0xff] 0.0
          %280 = vst [vmem:[#allocation2 + $0x40] sm:$0xff] 0.0
          %281 = vst [vmem:[#allocation2 + $0x48] sm:$0xff] 0.0
          %282 = vst [vmem:[#allocation2 + $0x50] sm:$0xff] 0.0
          %283 = vst [vmem:[#allocation2 + $0x58] sm:$0xff] 0.0
          %284 = vst [vmem:[#allocation2 + $0x60] sm:$0xff] 0.0
          %285 = vst [vmem:[#allocation2 + $0x68] sm:$0xff] 0.0
          %286 = vst [vmem:[#allocation2 + $0x70] sm:$0xff] 0.0
          %287 = vst [vmem:[#allocation2 + $0x78] sm:$0xff] 0.0
          %288 = vst [vmem:[#allocation2 + $0x80] sm:$0xff] 0.0
          %289 = vst [vmem:[#allocation2 + $0x88] sm:$0xff] 0.0
          %290 = vst [vmem:[#allocation2 + $0x90] sm:$0xff] 0.0
          %291 = vst [vmem:[#allocation2 + $0x98] sm:$0xff] 0.0
          %292 = vst [vmem:[#allocation2 + $0xa0] sm:$0xff] 0.0
          %293 = vst [vmem:[#allocation2 + $0xa8] sm:$0xff] 0.0
          %294 = vst [vmem:[#allocation2 + $0xb0] sm:$0xff] 0.0
          %295 = vst [vmem:[#allocation2 + $0xb8] sm:$0xff] 0.0
          %296 = vst [vmem:[#allocation2 + $0xc0] sm:$0xff] 0.0
          %297 = vst [vmem:[#allocation2 + $0xc8] sm:$0xff] 0.0
          %298 = vst [vmem:[#allocation2 + $0xd0] sm:$0xff] 0.0
          %299 = vst [vmem:[#allocation2 + $0xd8] sm:$0xff] 0.0
          %300 = vst [vmem:[#allocation2 + $0xe0] sm:$0xff] 0.0
          %301 = vst [vmem:[#allocation2 + $0xe8] sm:$0xff] 0.0
          %302 = vst [vmem:[#allocation2 + $0xf0] sm:$0xff] 0.0
          %303 = vst [vmem:[#allocation2 + $0xf8] sm:$0xff] 0.0
          %304 = vst [vmem:[#allocation2 + $0x100] sm:$0xff] 0.0
          %305 = vst [vmem:[#allocation2 + $0x108] sm:$0xff] 0.0
          %306 = vst [vmem:[#allocation2 + $0x110] sm:$0xff] 0.0
          %307 = vst [vmem:[#allocation2 + $0x118] sm:$0xff] 0.0
          %308 = vst [vmem:[#allocation2 + $0x120] sm:$0xff] 0.0
          %309 = vst [vmem:[#allocation2 + $0x128] sm:$0xff] 0.0
          %310 = vst [vmem:[#allocation2 + $0x130] sm:$0xff] 0.0
          %311 = vst [vmem:[#allocation2 + $0x138] sm:$0xff] 0.0
          %312 = vst [vmem:[#allocation2 + $0x140] sm:$0xff] 0.0
          %313 = vst [vmem:[#allocation2 + $0x148] sm:$0xff] 0.0
          %314 = vst [vmem:[#allocation2 + $0x150] sm:$0xff] 0.0
          %315 = vst [vmem:[#allocation2 + $0x158] sm:$0xff] 0.0
          %316 = vst [vmem:[#allocation2 + $0x160] sm:$0xff] 0.0
          %317 = vst [vmem:[#allocation2 + $0x168] sm:$0xff] 0.0
          %318 = vst [vmem:[#allocation2 + $0x170] sm:$0xff] 0.0
          %319 = vst [vmem:[#allocation2 + $0x178] sm:$0xff] 0.0
          %320 = vst [vmem:[#allocation2 + $0x180] sm:$0xff] 0.0
          %321 = vst [vmem:[#allocation2 + $0x188] sm:$0xff] 0.0
          %322 = vst [vmem:[#allocation2 + $0x190] sm:$0xff] 0.0
          %323 = vst [vmem:[#allocation2 + $0x198] sm:$0xff] 0.0
          %324 = vst [vmem:[#allocation2 + $0x1a0] sm:$0xff] 0.0
          %325 = vst [vmem:[#allocation2 + $0x1a8] sm:$0xff] 0.0
          %326 = vst [vmem:[#allocation2 + $0x1b0] sm:$0xff] 0.0
          %327 = vst [vmem:[#allocation2 + $0x1b8] sm:$0xff] 0.0
          %328 = vst [vmem:[#allocation2 + $0x1c0] sm:$0xff] 0.0
          %329 = vst [vmem:[#allocation2 + $0x1c8] sm:$0xff] 0.0
          %330 = vst [vmem:[#allocation2 + $0x1d0] sm:$0xff] 0.0
          %331 = vst [vmem:[#allocation2 + $0x1d8] sm:$0xff] 0.0
          %332 = vst [vmem:[#allocation2 + $0x1e0] sm:$0xff] 0.0
          %333 = vst [vmem:[#allocation2 + $0x1e8] sm:$0xff] 0.0
          %334 = vst [vmem:[#allocation2 + $0x1f0] sm:$0xff] 0.0
          %335 = vst [vmem:[#allocation2 + $0x1f8] sm:$0xff] 0.0
        $region44: #{tpu_custom_call.1} parent=31 // pred_fallthru
          _
        %v336 = vld [vmem:[#allocation2] sm:$0xff]
        %v337 = vld [vmem:[#allocation2 + $0x8] sm:$0xff]
        %v338 = vld [vmem:[#allocation2 + $0x10] sm:$0xff]
        %v339 = vld [vmem:[#allocation2 + $0x18] sm:$0xff]
        %v340 = vld [vmem:[#allocation2 + $0x20] sm:$0xff]
        %v341 = vld [vmem:[#allocation2 + $0x28] sm:$0xff]
        %v342 = vld [vmem:[#allocation2 + $0x30] sm:$0xff]
        %v343 = vld [vmem:[#allocation2 + $0x38] sm:$0xff]
        %v344 = vld [vmem:[#allocation2 + $0x40] sm:$0xff]
        %v345 = vld [vmem:[#allocation2 + $0x48] sm:$0xff]
        %v346 = vld [vmem:[#allocation2 + $0x50] sm:$0xff]
        %v347 = vld [vmem:[#allocation2 + $0x58] sm:$0xff]
        %v348 = vld [vmem:[#allocation2 + $0x60] sm:$0xff]
        %v349 = vld [vmem:[#allocation2 + $0x68] sm:$0xff]
        %v350 = vld [vmem:[#allocation2 + $0x70] sm:$0xff]
        %v351 = vld [vmem:[#allocation2 + $0x78] sm:$0xff]
        %v352 = vld [vmem:[#allocation2 + $0x80] sm:$0xff]
        %v353 = vld [vmem:[#allocation2 + $0x88] sm:$0xff]
        %v354 = vld [vmem:[#allocation2 + $0x90] sm:$0xff]
        %v355 = vld [vmem:[#allocation2 + $0x98] sm:$0xff]
        %v356 = vld [vmem:[#allocation2 + $0xa0] sm:$0xff]
        %v357 = vld [vmem:[#allocation2 + $0xa8] sm:$0xff]
        %v358 = vld [vmem:[#allocation2 + $0xb0] sm:$0xff]
        %v359 = vld [vmem:[#allocation2 + $0xb8] sm:$0xff]
        %v360 = vld [vmem:[#allocation2 + $0xc0] sm:$0xff]
        %v361 = vld [vmem:[#allocation2 + $0xc8] sm:$0xff]
        %v362 = vld [vmem:[#allocation2 + $0xd0] sm:$0xff]
        %v363 = vld [vmem:[#allocation2 + $0xd8] sm:$0xff]
        %v364 = vld [vmem:[#allocation2 + $0xe0] sm:$0xff]
        %v365 = vld [vmem:[#allocation2 + $0xe8] sm:$0xff]
        %v366 = vld [vmem:[#allocation2 + $0xf0] sm:$0xff]
        %v367 = vld [vmem:[#allocation2 + $0xf8] sm:$0xff]
        %v368 = vld [vmem:[#allocation2 + $0x100] sm:$0xff]
        %v369 = vld [vmem:[#allocation2 + $0x108] sm:$0xff]
        %v370 = vld [vmem:[#allocation2 + $0x110] sm:$0xff]
        %v371 = vld [vmem:[#allocation2 + $0x118] sm:$0xff]
        %v372 = vld [vmem:[#allocation2 + $0x120] sm:$0xff]
        %v373 = vld [vmem:[#allocation2 + $0x128] sm:$0xff]
        %v374 = vld [vmem:[#allocation2 + $0x130] sm:$0xff]
        %v375 = vld [vmem:[#allocation2 + $0x138] sm:$0xff]
        %v376 = vld [vmem:[#allocation2 + $0x140] sm:$0xff]
        %v377 = vld [vmem:[#allocation2 + $0x148] sm:$0xff]
        %v378 = vld [vmem:[#allocation2 + $0x150] sm:$0xff]
        %v379 = vld [vmem:[#allocation2 + $0x158] sm:$0xff]
        %v380 = vld [vmem:[#allocation2 + $0x160] sm:$0xff]
        %v381 = vld [vmem:[#allocation2 + $0x168] sm:$0xff]
        %v382 = vld [vmem:[#allocation2 + $0x170] sm:$0xff]
        %v383 = vld [vmem:[#allocation2 + $0x178] sm:$0xff]
        %v384 = vld [vmem:[#allocation2 + $0x180] sm:$0xff]
        %v385 = vld [vmem:[#allocation2 + $0x188] sm:$0xff]
        %v386 = vld [vmem:[#allocation2 + $0x190] sm:$0xff]
        %v387 = vld [vmem:[#allocation2 + $0x198] sm:$0xff]
        %v388 = vld [vmem:[#allocation2 + $0x1a0] sm:$0xff]
        %v389 = vld [vmem:[#allocation2 + $0x1a8] sm:$0xff]
        %v390 = vld [vmem:[#allocation2 + $0x1b0] sm:$0xff]
        %v391 = vld [vmem:[#allocation2 + $0x1b8] sm:$0xff]
        %v392 = vld [vmem:[#allocation2 + $0x1c0] sm:$0xff]
        %v393 = vld [vmem:[#allocation2 + $0x1c8] sm:$0xff]
        %v394 = vld [vmem:[#allocation2 + $0x1d0] sm:$0xff]
        %v395 = vld [vmem:[#allocation2 + $0x1d8] sm:$0xff]
        %v396 = vld [vmem:[#allocation2 + $0x1e0] sm:$0xff]
        %v397 = vld [vmem:[#allocation2 + $0x1e8] sm:$0xff]
        %v398 = vld [vmem:[#allocation2 + $0x1f0] sm:$0xff]
        %v399 = vld [vmem:[#allocation2 + $0x1f8] sm:$0xff]
        %v400 = vld [vmem:[#allocation3] sm:$0xff]
        %v401 = vld [vmem:[#allocation3 + $0x8] sm:$0xff]
        %v402 = vld [vmem:[#allocation3 + $0x10] sm:$0xff]
        %v403 = vld [vmem:[#allocation3 + $0x18] sm:$0xff]
        %v404 = vld [vmem:[#allocation3 + $0x20] sm:$0xff]
        %v405 = vld [vmem:[#allocation3 + $0x28] sm:$0xff]
        %v406 = vld [vmem:[#allocation3 + $0x30] sm:$0xff]
        %v407 = vld [vmem:[#allocation3 + $0x38] sm:$0xff]
        %v408 = vld [vmem:[#allocation3 + $0x40] sm:$0xff]
        %v409 = vld [vmem:[#allocation3 + $0x48] sm:$0xff]
        %v410 = vld [vmem:[#allocation3 + $0x50] sm:$0xff]
        %v411 = vld [vmem:[#allocation3 + $0x58] sm:$0xff]
        %v412 = vld [vmem:[#allocation3 + $0x60] sm:$0xff]
        %v413 = vld [vmem:[#allocation3 + $0x68] sm:$0xff]
        %v414 = vld [vmem:[#allocation3 + $0x70] sm:$0xff]
        %v415 = vld [vmem:[#allocation3 + $0x78] sm:$0xff]
        %v416 = vld [vmem:[#allocation3 + $0x80] sm:$0xff]
        %v417 = vld [vmem:[#allocation3 + $0x88] sm:$0xff]
        %v418 = vld [vmem:[#allocation3 + $0x90] sm:$0xff]
        %v419 = vld [vmem:[#allocation3 + $0x98] sm:$0xff]
        %v420 = vld [vmem:[#allocation3 + $0xa0] sm:$0xff]
        %v421 = vld [vmem:[#allocation3 + $0xa8] sm:$0xff]
        %v422 = vld [vmem:[#allocation3 + $0xb0] sm:$0xff]
        %v423 = vld [vmem:[#allocation3 + $0xb8] sm:$0xff]
        %v424 = vld [vmem:[#allocation3 + $0xc0] sm:$0xff]
        %v425 = vld [vmem:[#allocation3 + $0xc8] sm:$0xff]
        %v426 = vld [vmem:[#allocation3 + $0xd0] sm:$0xff]
        %v427 = vld [vmem:[#allocation3 + $0xd8] sm:$0xff]
        %v428 = vld [vmem:[#allocation3 + $0xe0] sm:$0xff]
        %v429 = vld [vmem:[#allocation3 + $0xe8] sm:$0xff]
        %v430 = vld [vmem:[#allocation3 + $0xf0] sm:$0xff]
        %v431 = vld [vmem:[#allocation3 + $0xf8] sm:$0xff]
        %v432 = vld [vmem:[%s230] sm:$0xff]
        %v433 = vld [vmem:[%s230 + $0x8] sm:$0xff]
        %v434 = vld [vmem:[%s230 + $0x10] sm:$0xff]
        %v435 = vld [vmem:[%s230 + $0x18] sm:$0xff]
        %v436 = vld [vmem:[%s230 + $0x20] sm:$0xff]
        %v437 = vld [vmem:[%s230 + $0x28] sm:$0xff]
        %v438 = vld [vmem:[%s230 + $0x30] sm:$0xff]
        %v439 = vld [vmem:[%s230 + $0x38] sm:$0xff]
        %v440 = vld [vmem:[%s230 + $0x40] sm:$0xff]
        %v441 = vld [vmem:[%s230 + $0x48] sm:$0xff]
        %v442 = vld [vmem:[%s230 + $0x50] sm:$0xff]
        %v443 = vld [vmem:[%s230 + $0x58] sm:$0xff]
        %v444 = vld [vmem:[%s230 + $0x60] sm:$0xff]
        %v445 = vld [vmem:[%s230 + $0x68] sm:$0xff]
        %v446 = vld [vmem:[%s230 + $0x70] sm:$0xff]
        %v447 = vld [vmem:[%s230 + $0x78] sm:$0xff]
        %v448 = vld [vmem:[%s230 + $0x80] sm:$0xff]
        %v449 = vld [vmem:[%s230 + $0x88] sm:$0xff]
        %v450 = vld [vmem:[%s230 + $0x90] sm:$0xff]
        %v451 = vld [vmem:[%s230 + $0x98] sm:$0xff]
        %v452 = vld [vmem:[%s230 + $0xa0] sm:$0xff]
        %v453 = vld [vmem:[%s230 + $0xa8] sm:$0xff]
        %v454 = vld [vmem:[%s230 + $0xb0] sm:$0xff]
        %v455 = vld [vmem:[%s230 + $0xb8] sm:$0xff]
        %v456 = vld [vmem:[%s230 + $0xc0] sm:$0xff]
        %v457 = vld [vmem:[%s230 + $0xc8] sm:$0xff]
        %v458 = vld [vmem:[%s230 + $0xd0] sm:$0xff]
        %v459 = vld [vmem:[%s230 + $0xd8] sm:$0xff]
        %v460 = vld [vmem:[%s230 + $0xe0] sm:$0xff]
        %v461 = vld [vmem:[%s230 + $0xe8] sm:$0xff]
        %v462 = vld [vmem:[%s230 + $0xf0] sm:$0xff]
        %v463 = vld [vmem:[%s230 + $0xf8] sm:$0xff]
        %v496 = vunpack.c.l.b16 %v400
        %v497 = vunpack.c.h.b16 %v400
        %v498 = vunpack.c.l.b16 %v401
        %v499 = vunpack.c.h.b16 %v401
        %v500 = vunpack.c.l.b16 %v402
        %v501 = vunpack.c.h.b16 %v402
        %v502 = vunpack.c.l.b16 %v403
        %v503 = vunpack.c.h.b16 %v403
        %v504 = vunpack.c.l.b16 %v404
        %v505 = vunpack.c.h.b16 %v404
        %v506 = vunpack.c.l.b16 %v405
        %v507 = vunpack.c.h.b16 %v405
        %v508 = vunpack.c.l.b16 %v406
        %v509 = vunpack.c.h.b16 %v406
        %v510 = vunpack.c.l.b16 %v407
        %v511 = vunpack.c.h.b16 %v407
        %v512 = vunpack.c.l.b16 %v408
        %v513 = vunpack.c.h.b16 %v408
        %v514 = vunpack.c.l.b16 %v409
        %v515 = vunpack.c.h.b16 %v409
        %v516 = vunpack.c.l.b16 %v410
        %v517 = vunpack.c.h.b16 %v410
        %v518 = vunpack.c.l.b16 %v411
        %v519 = vunpack.c.h.b16 %v411
        %v520 = vunpack.c.l.b16 %v412
        %v521 = vunpack.c.h.b16 %v412
        %v522 = vunpack.c.l.b16 %v413
        %v523 = vunpack.c.h.b16 %v413
        %v524 = vunpack.c.l.b16 %v414
        %v525 = vunpack.c.h.b16 %v414
        %v526 = vunpack.c.l.b16 %v415
        %v527 = vunpack.c.h.b16 %v415
        %v528 = vunpack.c.l.b16 %v416
        %v529 = vunpack.c.h.b16 %v416
        %v530 = vunpack.c.l.b16 %v417
        %v531 = vunpack.c.h.b16 %v417
        %v532 = vunpack.c.l.b16 %v418
        %v533 = vunpack.c.h.b16 %v418
        %v534 = vunpack.c.l.b16 %v419
        %v535 = vunpack.c.h.b16 %v419
        %v536 = vunpack.c.l.b16 %v420
        %v537 = vunpack.c.h.b16 %v420
        %v538 = vunpack.c.l.b16 %v421
        %v539 = vunpack.c.h.b16 %v421
        %v540 = vunpack.c.l.b16 %v422
        %v541 = vunpack.c.h.b16 %v422
        %v542 = vunpack.c.l.b16 %v423
        %v543 = vunpack.c.h.b16 %v423
        %v544 = vunpack.c.l.b16 %v424
        %v545 = vunpack.c.h.b16 %v424
        %v546 = vunpack.c.l.b16 %v425
        %v547 = vunpack.c.h.b16 %v425
        %v548 = vunpack.c.l.b16 %v426
        %v549 = vunpack.c.h.b16 %v426
        %v550 = vunpack.c.l.b16 %v427
        %v551 = vunpack.c.h.b16 %v427
        %v552 = vunpack.c.l.b16 %v428
        %v553 = vunpack.c.h.b16 %v428
        %v554 = vunpack.c.l.b16 %v429
        %v555 = vunpack.c.h.b16 %v429
        %v556 = vunpack.c.l.b16 %v430
        %v557 = vunpack.c.h.b16 %v430
        %v558 = vunpack.c.l.b16 %v431
        %v559 = vunpack.c.h.b16 %v431
        %v560 = vpack.c.b16 %v498, %v496
        %v561 = vpack.c.b16 %v499, %v497
        %v562 = vpack.c.b16 %v502, %v500
        %v563 = vpack.c.b16 %v503, %v501
        %v564 = vpack.c.b16 %v506, %v504
        %v565 = vpack.c.b16 %v507, %v505
        %v566 = vpack.c.b16 %v510, %v508
        %v567 = vpack.c.b16 %v511, %v509
        %v568 = vpack.c.b16 %v514, %v512
        %v569 = vpack.c.b16 %v515, %v513
        %v570 = vpack.c.b16 %v518, %v516
        %v571 = vpack.c.b16 %v519, %v517
        %v572 = vpack.c.b16 %v522, %v520
        %v573 = vpack.c.b16 %v523, %v521
        %v574 = vpack.c.b16 %v526, %v524
        %v575 = vpack.c.b16 %v527, %v525
        %v576 = vpack.c.b16 %v530, %v528
        %v577 = vpack.c.b16 %v531, %v529
        %v578 = vpack.c.b16 %v534, %v532
        %v579 = vpack.c.b16 %v535, %v533
        %v580 = vpack.c.b16 %v538, %v536
        %v581 = vpack.c.b16 %v539, %v537
        %v582 = vpack.c.b16 %v542, %v540
        %v583 = vpack.c.b16 %v543, %v541
        %v584 = vpack.c.b16 %v546, %v544
        %v585 = vpack.c.b16 %v547, %v545
        %v586 = vpack.c.b16 %v550, %v548
        %v587 = vpack.c.b16 %v551, %v549
        %v588 = vpack.c.b16 %v554, %v552
        %v589 = vpack.c.b16 %v555, %v553
        %v590 = vpack.c.b16 %v558, %v556
        %v591 = vpack.c.b16 %v559, %v557
        %v656 = vunpack.c.l.b16 %v432
        %v657 = vunpack.c.h.b16 %v432
        %v658 = vunpack.c.l.b16 %v433
        %v659 = vunpack.c.h.b16 %v433
        %v660 = vunpack.c.l.b16 %v434
        %v661 = vunpack.c.h.b16 %v434
        %v662 = vunpack.c.l.b16 %v435
        %v663 = vunpack.c.h.b16 %v435
        %v664 = vunpack.c.l.b16 %v436
        %v665 = vunpack.c.h.b16 %v436
        %v666 = vunpack.c.l.b16 %v437
        %v667 = vunpack.c.h.b16 %v437
        %v668 = vunpack.c.l.b16 %v438
        %v669 = vunpack.c.h.b16 %v438
        %v670 = vunpack.c.l.b16 %v439
        %v671 = vunpack.c.h.b16 %v439
        %v672 = vunpack.c.l.b16 %v440
        %v673 = vunpack.c.h.b16 %v440
        %v674 = vunpack.c.l.b16 %v441
        %v675 = vunpack.c.h.b16 %v441
        %v676 = vunpack.c.l.b16 %v442
        %v677 = vunpack.c.h.b16 %v442
        %v678 = vunpack.c.l.b16 %v443
        %v679 = vunpack.c.h.b16 %v443
        %v680 = vunpack.c.l.b16 %v444
        %v681 = vunpack.c.h.b16 %v444
        %v682 = vunpack.c.l.b16 %v445
        %v683 = vunpack.c.h.b16 %v445
        %v684 = vunpack.c.l.b16 %v446
        %v685 = vunpack.c.h.b16 %v446
        %v686 = vunpack.c.l.b16 %v447
        %v687 = vunpack.c.h.b16 %v447
        %v688 = vunpack.c.l.b16 %v448
        %v689 = vunpack.c.h.b16 %v448
        %v690 = vunpack.c.l.b16 %v449
        %v691 = vunpack.c.h.b16 %v449
        %v692 = vunpack.c.l.b16 %v450
        %v693 = vunpack.c.h.b16 %v450
        %v694 = vunpack.c.l.b16 %v451
        %v695 = vunpack.c.h.b16 %v451
        %v696 = vunpack.c.l.b16 %v452
        %v697 = vunpack.c.h.b16 %v452
        %v698 = vunpack.c.l.b16 %v453
        %v699 = vunpack.c.h.b16 %v453
        %v700 = vunpack.c.l.b16 %v454
        %v701 = vunpack.c.h.b16 %v454
        %v702 = vunpack.c.l.b16 %v455
        %v703 = vunpack.c.h.b16 %v455
        %v704 = vunpack.c.l.b16 %v456
        %v705 = vunpack.c.h.b16 %v456
        %v706 = vunpack.c.l.b16 %v457
        %v707 = vunpack.c.h.b16 %v457
        %v708 = vunpack.c.l.b16 %v458
        %v709 = vunpack.c.h.b16 %v458
        %v710 = vunpack.c.l.b16 %v459
        %v711 = vunpack.c.h.b16 %v459
        %v712 = vunpack.c.l.b16 %v460
        %v713 = vunpack.c.h.b16 %v460
        %v714 = vunpack.c.l.b16 %v461
        %v715 = vunpack.c.h.b16 %v461
        %v716 = vunpack.c.l.b16 %v462
        %v717 = vunpack.c.h.b16 %v462
        %v718 = vunpack.c.l.b16 %v463
        %v719 = vunpack.c.h.b16 %v463
        %v720 = vpack.c.b16 %v658, %v656
        %v721 = vpack.c.b16 %v659, %v657
        %v722 = vpack.c.b16 %v662, %v660
        %v723 = vpack.c.b16 %v663, %v661
        %v724 = vpack.c.b16 %v666, %v664
        %v725 = vpack.c.b16 %v667, %v665
        %v726 = vpack.c.b16 %v670, %v668
        %v727 = vpack.c.b16 %v671, %v669
        %v728 = vpack.c.b16 %v674, %v672
        %v729 = vpack.c.b16 %v675, %v673
        %v730 = vpack.c.b16 %v678, %v676
        %v731 = vpack.c.b16 %v679, %v677
        %v732 = vpack.c.b16 %v682, %v680
        %v733 = vpack.c.b16 %v683, %v681
        %v734 = vpack.c.b16 %v686, %v684
        %v735 = vpack.c.b16 %v687, %v685
        %v736 = vpack.c.b16 %v690, %v688
        %v737 = vpack.c.b16 %v691, %v689
        %v738 = vpack.c.b16 %v694, %v692
        %v739 = vpack.c.b16 %v695, %v693
        %v740 = vpack.c.b16 %v698, %v696
        %v741 = vpack.c.b16 %v699, %v697
        %v742 = vpack.c.b16 %v702, %v700
        %v743 = vpack.c.b16 %v703, %v701
        %v744 = vpack.c.b16 %v706, %v704
        %v745 = vpack.c.b16 %v707, %v705
        %v746 = vpack.c.b16 %v710, %v708
        %v747 = vpack.c.b16 %v711, %v709
        %v748 = vpack.c.b16 %v714, %v712
        %v749 = vpack.c.b16 %v715, %v713
        %v750 = vpack.c.b16 %v718, %v716
        %v751 = vpack.c.b16 %v719, %v717
        %784 = vmatprep.subr.bf16.mxu0 %v721
        %785 = vmatpush1.bf16.msra.mxu0 %v720
        %786 = vmatprep.subr.bf16.mxu0 %v723
        %787 = vmatpush1.bf16.msra.mxu0 %v722
        %788 = vmatprep.subr.bf16.mxu0 %v725
        %789 = vmatpush1.bf16.msra.mxu0 %v724
        %790 = vmatprep.subr.bf16.mxu0 %v727
        %791 = vmatpush1.bf16.msra.mxu0 %v726
        %792 = vmatprep.subr.bf16.mxu0 %v729
        %793 = vmatpush1.bf16.msra.mxu0 %v728
        %794 = vmatprep.subr.bf16.mxu0 %v731
        %795 = vmatpush1.bf16.msra.mxu0 %v730
        %796 = vmatprep.subr.bf16.mxu0 %v733
        %797 = vmatpush1.bf16.msra.mxu0 %v732
        %798 = vmatprep.subr.bf16.mxu0 %v735
        %799 = vmatpush1.bf16.msra.mxu0 %v734
        %800 = vmatprep.subr.bf16.mxu0 %v737
        %801 = vmatpush1.bf16.msra.mxu0 %v736
        %802 = vmatprep.subr.bf16.mxu0 %v739
        %803 = vmatpush1.bf16.msra.mxu0 %v738
        %804 = vmatprep.subr.bf16.mxu0 %v741
        %805 = vmatpush1.bf16.msra.mxu0 %v740
        %806 = vmatprep.subr.bf16.mxu0 %v743
        %807 = vmatpush1.bf16.msra.mxu0 %v742
        %808 = vmatprep.subr.bf16.mxu0 %v745
        %809 = vmatpush1.bf16.msra.mxu0 %v744
        %810 = vmatprep.subr.bf16.mxu0 %v747
        %811 = vmatpush1.bf16.msra.mxu0 %v746
        %812 = vmatprep.subr.bf16.mxu0 %v749
        %813 = vmatpush1.bf16.msra.mxu0 %v748
        %814 = vmatprep.subr.bf16.mxu0 %v751
        %815 = vmatpush1.bf16.msra.mxu0 %v750
        %816 = vmatprep.mubr.bf16.mxu0 %v561
        %817 = vmatmul.mubr.bf16.gmra.mrb[0].mxu0 %v560
        %v818 = vpop.f32.mrb[0].mxu0
        %v819 = vadd.f32 0.0, %v818
        %v820 = vpop.f32.mrb[0].mxu0
        %v821 = vadd.f32 0.0, %v820
        %v822 = vpop.f32.mrb[0].mxu0
        %v823 = vadd.f32 0.0, %v822
        %v824 = vpop.f32.mrb[0].mxu0
        %v825 = vadd.f32 0.0, %v824
        %826 = vmatprep.mubr.bf16.mxu0 %v563
        %827 = vmatmul.mubr.bf16.gmra.mrb[0].mxu0 %v562
        %v828 = vpop.f32.mrb[0].mxu0
        %v829 = vadd.f32 0.0, %v828
        %v830 = vpop.f32.mrb[0].mxu0
        %v831 = vadd.f32 0.0, %v830
        %v832 = vpop.f32.mrb[0].mxu0
        %v833 = vadd.f32 0.0, %v832
        %v834 = vpop.f32.mrb[0].mxu0
        %v835 = vadd.f32 0.0, %v834
        %836 = vmatprep.mubr.bf16.mxu0 %v565
        %837 = vmatmul.mubr.bf16.gmra.mrb[0].mxu0 %v564
        %v838 = vpop.f32.mrb[0].mxu0
        %v839 = vadd.f32 0.0, %v838
        %v840 = vpop.f32.mrb[0].mxu0
        %v841 = vadd.f32 0.0, %v840
        %v842 = vpop.f32.mrb[0].mxu0
        %v843 = vadd.f32 0.0, %v842
        %v844 = vpop.f32.mrb[0].mxu0
        %v845 = vadd.f32 0.0, %v844
        %846 = vmatprep.mubr.bf16.mxu0 %v567
        %847 = vmatmul.mubr.bf16.gmra.mrb[0].mxu0 %v566
        %v848 = vpop.f32.mrb[0].mxu0
        %v849 = vadd.f32 0.0, %v848
        %v850 = vpop.f32.mrb[0].mxu0
        %v851 = vadd.f32 0.0, %v850
        %v852 = vpop.f32.mrb[0].mxu0
        %v853 = vadd.f32 0.0, %v852
        %v854 = vpop.f32.mrb[0].mxu0
        %v855 = vadd.f32 0.0, %v854
        %856 = vmatprep.mubr.bf16.mxu0 %v569
        %857 = vmatmul.mubr.bf16.gmra.mrb[0].mxu0 %v568
        %v858 = vpop.f32.mrb[0].mxu0
        %v859 = vadd.f32 0.0, %v858
        %v860 = vpop.f32.mrb[0].mxu0
        %v861 = vadd.f32 0.0, %v860
        %v862 = vpop.f32.mrb[0].mxu0
        %v863 = vadd.f32 0.0, %v862
        %v864 = vpop.f32.mrb[0].mxu0
        %v865 = vadd.f32 0.0, %v864
        %866 = vmatprep.mubr.bf16.mxu0 %v571
        %867 = vmatmul.mubr.bf16.gmra.mrb[0].mxu0 %v570
        %v868 = vpop.f32.mrb[0].mxu0
        %v869 = vadd.f32 0.0, %v868
        %v870 = vpop.f32.mrb[0].mxu0
        %v871 = vadd.f32 0.0, %v870
        %v872 = vpop.f32.mrb[0].mxu0
        %v873 = vadd.f32 0.0, %v872
        %v874 = vpop.f32.mrb[0].mxu0
        %v875 = vadd.f32 0.0, %v874
        %876 = vmatprep.mubr.bf16.mxu0 %v573
        %877 = vmatmul.mubr.bf16.gmra.mrb[0].mxu0 %v572
        %v878 = vpop.f32.mrb[0].mxu0
        %v879 = vadd.f32 0.0, %v878
        %v880 = vpop.f32.mrb[0].mxu0
        %v881 = vadd.f32 0.0, %v880
        %v882 = vpop.f32.mrb[0].mxu0
        %v883 = vadd.f32 0.0, %v882
        %v884 = vpop.f32.mrb[0].mxu0
        %v885 = vadd.f32 0.0, %v884
        %886 = vmatprep.mubr.bf16.mxu0 %v575
        %887 = vmatmul.mubr.bf16.gmra.mrb[0].mxu0 %v574
        %v888 = vpop.f32.mrb[0].mxu0
        %v889 = vadd.f32 0.0, %v888
        %v890 = vpop.f32.mrb[0].mxu0
        %v891 = vadd.f32 0.0, %v890
        %v892 = vpop.f32.mrb[0].mxu0
        %v893 = vadd.f32 0.0, %v892
        %v894 = vpop.f32.mrb[0].mxu0
        %v895 = vadd.f32 0.0, %v894
        %896 = vmatprep.mubr.bf16.mxu0 %v577
        %897 = vmatmul.mubr.bf16.gmra.mrb[0].mxu0 %v576
        %v898 = vpop.f32.mrb[0].mxu0
        %v899 = vadd.f32 0.0, %v898
        %v900 = vpop.f32.mrb[0].mxu0
        %v901 = vadd.f32 0.0, %v900
        %v902 = vpop.f32.mrb[0].mxu0
        %v903 = vadd.f32 0.0, %v902
        %v904 = vpop.f32.mrb[0].mxu0
        %v905 = vadd.f32 0.0, %v904
        %906 = vmatprep.mubr.bf16.mxu0 %v579
        %907 = vmatmul.mubr.bf16.gmra.mrb[0].mxu0 %v578
        %v908 = vpop.f32.mrb[0].mxu0
        %v909 = vadd.f32 0.0, %v908
        %v910 = vpop.f32.mrb[0].mxu0
        %v911 = vadd.f32 0.0, %v910
        %v912 = vpop.f32.mrb[0].mxu0
        %v913 = vadd.f32 0.0, %v912
        %v914 = vpop.f32.mrb[0].mxu0
        %v915 = vadd.f32 0.0, %v914
        %916 = vmatprep.mubr.bf16.mxu0 %v581
        %917 = vmatmul.mubr.bf16.gmra.mrb[0].mxu0 %v580
        %v918 = vpop.f32.mrb[0].mxu0
        %v919 = vadd.f32 0.0, %v918
        %v920 = vpop.f32.mrb[0].mxu0
        %v921 = vadd.f32 0.0, %v920
        %v922 = vpop.f32.mrb[0].mxu0
        %v923 = vadd.f32 0.0, %v922
        %v924 = vpop.f32.mrb[0].mxu0
        %v925 = vadd.f32 0.0, %v924
        %926 = vmatprep.mubr.bf16.mxu0 %v583
        %927 = vmatmul.mubr.bf16.gmra.mrb[0].mxu0 %v582
        %v928 = vpop.f32.mrb[0].mxu0
        %v929 = vadd.f32 0.0, %v928
        %v930 = vpop.f32.mrb[0].mxu0
        %v931 = vadd.f32 0.0, %v930
        %v932 = vpop.f32.mrb[0].mxu0
        %v933 = vadd.f32 0.0, %v932
        %v934 = vpop.f32.mrb[0].mxu0
        %v935 = vadd.f32 0.0, %v934
        %936 = vmatprep.mubr.bf16.mxu0 %v585
        %937 = vmatmul.mubr.bf16.gmra.mrb[0].mxu0 %v584
        %v938 = vpop.f32.mrb[0].mxu0
        %v939 = vadd.f32 0.0, %v938
        %v940 = vpop.f32.mrb[0].mxu0
        %v941 = vadd.f32 0.0, %v940
        %v942 = vpop.f32.mrb[0].mxu0
        %v943 = vadd.f32 0.0, %v942
        %v944 = vpop.f32.mrb[0].mxu0
        %v945 = vadd.f32 0.0, %v944
        %946 = vmatprep.mubr.bf16.mxu0 %v587
        %947 = vmatmul.mubr.bf16.gmra.mrb[0].mxu0 %v586
        %v948 = vpop.f32.mrb[0].mxu0
        %v949 = vadd.f32 0.0, %v948
        %v950 = vpop.f32.mrb[0].mxu0
        %v951 = vadd.f32 0.0, %v950
        %v952 = vpop.f32.mrb[0].mxu0
        %v953 = vadd.f32 0.0, %v952
        %v954 = vpop.f32.mrb[0].mxu0
        %v955 = vadd.f32 0.0, %v954
        %956 = vmatprep.mubr.bf16.mxu0 %v589
        %957 = vmatmul.mubr.bf16.gmra.mrb[0].mxu0 %v588
        %v958 = vpop.f32.mrb[0].mxu0
        %v959 = vadd.f32 0.0, %v958
        %v960 = vpop.f32.mrb[0].mxu0
        %v961 = vadd.f32 0.0, %v960
        %v962 = vpop.f32.mrb[0].mxu0
        %v963 = vadd.f32 0.0, %v962
        %v964 = vpop.f32.mrb[0].mxu0
        %v965 = vadd.f32 0.0, %v964
        %966 = vmatprep.mubr.bf16.mxu0 %v591
        %967 = vmatmul.mubr.bf16.gmra.mrb[0].mxu0 %v590
        %v968 = vpop.f32.mrb[0].mxu0
        %v969 = vadd.f32 0.0, %v968
        %v970 = vpop.f32.mrb[0].mxu0
        %v971 = vadd.f32 0.0, %v970
        %v972 = vpop.f32.mrb[0].mxu0
        %v973 = vadd.f32 0.0, %v972
        %v974 = vpop.f32.mrb[0].mxu0
        %v975 = vadd.f32 0.0, %v974
        %976 = vdwg.mxu0
        %v977 = vadd.f32 %v336, %v819
        %v978 = vadd.f32 %v337, %v821
        %v979 = vadd.f32 %v338, %v823
        %v980 = vadd.f32 %v339, %v825
        %v981 = vadd.f32 %v340, %v829
        %v982 = vadd.f32 %v341, %v831
        %v983 = vadd.f32 %v342, %v833
        %v984 = vadd.f32 %v343, %v835
        %v985 = vadd.f32 %v344, %v839
        %v986 = vadd.f32 %v345, %v841
        %v987 = vadd.f32 %v346, %v843
        %v988 = vadd.f32 %v347, %v845
        %v989 = vadd.f32 %v348, %v849
        %v990 = vadd.f32 %v349, %v851
        %v991 = vadd.f32 %v350, %v853
        %v992 = vadd.f32 %v351, %v855
        %v993 = vadd.f32 %v352, %v859
        %v994 = vadd.f32 %v353, %v861
        %v995 = vadd.f32 %v354, %v863
        %v996 = vadd.f32 %v355, %v865
        %v997 = vadd.f32 %v356, %v869
        %v998 = vadd.f32 %v357, %v871
        %v999 = vadd.f32 %v358, %v873
        %v1000 = vadd.f32 %v359, %v875
        %v1001 = vadd.f32 %v360, %v879
        %v1002 = vadd.f32 %v361, %v881
        %v1003 = vadd.f32 %v362, %v883
        %v1004 = vadd.f32 %v363, %v885
        %v1005 = vadd.f32 %v364, %v889
        %v1006 = vadd.f32 %v365, %v891
        %v1007 = vadd.f32 %v366, %v893
        %v1008 = vadd.f32 %v367, %v895
        %v1009 = vadd.f32 %v368, %v899
        %v1010 = vadd.f32 %v369, %v901
        %v1011 = vadd.f32 %v370, %v903
        %v1012 = vadd.f32 %v371, %v905
        %v1013 = vadd.f32 %v372, %v909
        %v1014 = vadd.f32 %v373, %v911
        %v1015 = vadd.f32 %v374, %v913
        %v1016 = vadd.f32 %v375, %v915
        %v1017 = vadd.f32 %v376, %v919
        %v1018 = vadd.f32 %v377, %v921
        %v1019 = vadd.f32 %v378, %v923
        %v1020 = vadd.f32 %v379, %v925
        %v1021 = vadd.f32 %v380, %v929
        %v1022 = vadd.f32 %v381, %v931
        %v1023 = vadd.f32 %v382, %v933
        %v1024 = vadd.f32 %v383, %v935
        %v1025 = vadd.f32 %v384, %v939
        %v1026 = vadd.f32 %v385, %v941
        %v1027 = vadd.f32 %v386, %v943
        %v1028 = vadd.f32 %v387, %v945
        %v1029 = vadd.f32 %v388, %v949
        %v1030 = vadd.f32 %v389, %v951
        %v1031 = vadd.f32 %v390, %v953
        %v1032 = vadd.f32 %v391, %v955
        %v1033 = vadd.f32 %v392, %v959
        %v1034 = vadd.f32 %v393, %v961
        %v1035 = vadd.f32 %v394, %v963
        %v1036 = vadd.f32 %v395, %v965
        %v1037 = vadd.f32 %v396, %v969
        %v1038 = vadd.f32 %v397, %v971
        %v1039 = vadd.f32 %v398, %v973
        %v1040 = vadd.f32 %v399, %v975
        %1041 = vst [vmem:[#allocation2] sm:$0xff] %v977
        %1042 = vst [vmem:[#allocation2 + $0x8] sm:$0xff] %v978
        %1043 = vst [vmem:[#allocation2 + $0x10] sm:$0xff] %v979
        %1044 = vst [vmem:[#allocation2 + $0x18] sm:$0xff] %v980
        %1045 = vst [vmem:[#allocation2 + $0x20] sm:$0xff] %v981
        %1046 = vst [vmem:[#allocation2 + $0x28] sm:$0xff] %v982
        %1047 = vst [vmem:[#allocation2 + $0x30] sm:$0xff] %v983
        %1048 = vst [vmem:[#allocation2 + $0x38] sm:$0xff] %v984
        %1049 = vst [vmem:[#allocation2 + $0x40] sm:$0xff] %v985
        %1050 = vst [vmem:[#allocation2 + $0x48] sm:$0xff] %v986
        %1051 = vst [vmem:[#allocation2 + $0x50] sm:$0xff] %v987
        %1052 = vst [vmem:[#allocation2 + $0x58] sm:$0xff] %v988
        %1053 = vst [vmem:[#allocation2 + $0x60] sm:$0xff] %v989
        %1054 = vst [vmem:[#allocation2 + $0x68] sm:$0xff] %v990
        %1055 = vst [vmem:[#allocation2 + $0x70] sm:$0xff] %v991
        %1056 = vst [vmem:[#allocation2 + $0x78] sm:$0xff] %v992
        %1057 = vst [vmem:[#allocation2 + $0x80] sm:$0xff] %v993
        %1058 = vst [vmem:[#allocation2 + $0x88] sm:$0xff] %v994
        %1059 = vst [vmem:[#allocation2 + $0x90] sm:$0xff] %v995
        %1060 = vst [vmem:[#allocation2 + $0x98] sm:$0xff] %v996
        %1061 = vst [vmem:[#allocation2 + $0xa0] sm:$0xff] %v997
        %1062 = vst [vmem:[#allocation2 + $0xa8] sm:$0xff] %v998
        %1063 = vst [vmem:[#allocation2 + $0xb0] sm:$0xff] %v999
        %1064 = vst [vmem:[#allocation2 + $0xb8] sm:$0xff] %v1000
        %1065 = vst [vmem:[#allocation2 + $0xc0] sm:$0xff] %v1001
        %1066 = vst [vmem:[#allocation2 + $0xc8] sm:$0xff] %v1002
        %1067 = vst [vmem:[#allocation2 + $0xd0] sm:$0xff] %v1003
        %1068 = vst [vmem:[#allocation2 + $0xd8] sm:$0xff] %v1004
        %1069 = vst [vmem:[#allocation2 + $0xe0] sm:$0xff] %v1005
        %1070 = vst [vmem:[#allocation2 + $0xe8] sm:$0xff] %v1006
        %1071 = vst [vmem:[#allocation2 + $0xf0] sm:$0xff] %v1007
        %1072 = vst [vmem:[#allocation2 + $0xf8] sm:$0xff] %v1008
        %1073 = vst [vmem:[#allocation2 + $0x100] sm:$0xff] %v1009
        %1074 = vst [vmem:[#allocation2 + $0x108] sm:$0xff] %v1010
        %1075 = vst [vmem:[#allocation2 + $0x110] sm:$0xff] %v1011
        %1076 = vst [vmem:[#allocation2 + $0x118] sm:$0xff] %v1012
        %1077 = vst [vmem:[#allocation2 + $0x120] sm:$0xff] %v1013
        %1078 = vst [vmem:[#allocation2 + $0x128] sm:$0xff] %v1014
        %1079 = vst [vmem:[#allocation2 + $0x130] sm:$0xff] %v1015
        %1080 = vst [vmem:[#allocation2 + $0x138] sm:$0xff] %v1016
        %1081 = vst [vmem:[#allocation2 + $0x140] sm:$0xff] %v1017
        %1082 = vst [vmem:[#allocation2 + $0x148] sm:$0xff] %v1018
        %1083 = vst [vmem:[#allocation2 + $0x150] sm:$0xff] %v1019
        %1084 = vst [vmem:[#allocation2 + $0x158] sm:$0xff] %v1020
        %1085 = vst [vmem:[#allocation2 + $0x160] sm:$0xff] %v1021
        %1086 = vst [vmem:[#allocation2 + $0x168] sm:$0xff] %v1022
        %1087 = vst [vmem:[#allocation2 + $0x170] sm:$0xff] %v1023
        %1088 = vst [vmem:[#allocation2 + $0x178] sm:$0xff] %v1024
        %1089 = vst [vmem:[#allocation2 + $0x180] sm:$0xff] %v1025
        %1090 = vst [vmem:[#allocation2 + $0x188] sm:$0xff] %v1026
        %1091 = vst [vmem:[#allocation2 + $0x190] sm:$0xff] %v1027
        %1092 = vst [vmem:[#allocation2 + $0x198] sm:$0xff] %v1028
        %1093 = vst [vmem:[#allocation2 + $0x1a0] sm:$0xff] %v1029
        %1094 = vst [vmem:[#allocation2 + $0x1a8] sm:$0xff] %v1030
        %1095 = vst [vmem:[#allocation2 + $0x1b0] sm:$0xff] %v1031
        %1096 = vst [vmem:[#allocation2 + $0x1b8] sm:$0xff] %v1032
        %1097 = vst [vmem:[#allocation2 + $0x1c0] sm:$0xff] %v1033
        %1098 = vst [vmem:[#allocation2 + $0x1c8] sm:$0xff] %v1034
        %1099 = vst [vmem:[#allocation2 + $0x1d0] sm:$0xff] %v1035
        %1100 = vst [vmem:[#allocation2 + $0x1d8] sm:$0xff] %v1036
        %1101 = vst [vmem:[#allocation2 + $0x1e0] sm:$0xff] %v1037
        %1102 = vst [vmem:[#allocation2 + $0x1e8] sm:$0xff] %v1038
        %1103 = vst [vmem:[#allocation2 + $0x1f0] sm:$0xff] %v1039
        %1104 = vst [vmem:[#allocation2 + $0x1f8] sm:$0xff] %v1040
        // Predicated region
        $region45: #{tpu_custom_call.1} parent=31 // pred_check
          %p1105 = pneg %p268
        $region46: #{tpu_custom_call.1} parent=31 // pred_check_branch
          %1107 = sbr.rel (%p1105) target = $region48
        $region47: #{tpu_custom_call.1} parent=31 // pred_region
          %v1108 = vld [vmem:[#allocation2] sm:$0xff]
          %v1109 = vld [vmem:[#allocation2 + $0x8] sm:$0xff]
          %v1110 = vld [vmem:[#allocation2 + $0x10] sm:$0xff]
          %v1111 = vld [vmem:[#allocation2 + $0x18] sm:$0xff]
          %v1112 = vld [vmem:[#allocation2 + $0x20] sm:$0xff]
          %v1113 = vld [vmem:[#allocation2 + $0x28] sm:$0xff]
          %v1114 = vld [vmem:[#allocation2 + $0x30] sm:$0xff]
          %v1115 = vld [vmem:[#allocation2 + $0x38] sm:$0xff]
          %v1116 = vld [vmem:[#allocation2 + $0x40] sm:$0xff]
          %v1117 = vld [vmem:[#allocation2 + $0x48] sm:$0xff]
          %v1118 = vld [vmem:[#allocation2 + $0x50] sm:$0xff]
          %v1119 = vld [vmem:[#allocation2 + $0x58] sm:$0xff]
          %v1120 = vld [vmem:[#allocation2 + $0x60] sm:$0xff]
          %v1121 = vld [vmem:[#allocation2 + $0x68] sm:$0xff]
          %v1122 = vld [vmem:[#allocation2 + $0x70] sm:$0xff]
          %v1123 = vld [vmem:[#allocation2 + $0x78] sm:$0xff]
          %v1124 = vld [vmem:[#allocation2 + $0x80] sm:$0xff]
          %v1125 = vld [vmem:[#allocation2 + $0x88] sm:$0xff]
          %v1126 = vld [vmem:[#allocation2 + $0x90] sm:$0xff]
          %v1127 = vld [vmem:[#allocation2 + $0x98] sm:$0xff]
          %v1128 = vld [vmem:[#allocation2 + $0xa0] sm:$0xff]
          %v1129 = vld [vmem:[#allocation2 + $0xa8] sm:$0xff]
          %v1130 = vld [vmem:[#allocation2 + $0xb0] sm:$0xff]
          %v1131 = vld [vmem:[#allocation2 + $0xb8] sm:$0xff]
          %v1132 = vld [vmem:[#allocation2 + $0xc0] sm:$0xff]
          %v1133 = vld [vmem:[#allocation2 + $0xc8] sm:$0xff]
          %v1134 = vld [vmem:[#allocation2 + $0xd0] sm:$0xff]
          %v1135 = vld [vmem:[#allocation2 + $0xd8] sm:$0xff]
          %v1136 = vld [vmem:[#allocation2 + $0xe0] sm:$0xff]
          %v1137 = vld [vmem:[#allocation2 + $0xe8] sm:$0xff]
          %v1138 = vld [vmem:[#allocation2 + $0xf0] sm:$0xff]
          %v1139 = vld [vmem:[#allocation2 + $0xf8] sm:$0xff]
          %v1140 = vld [vmem:[#allocation2 + $0x100] sm:$0xff]
          %v1141 = vld [vmem:[#allocation2 + $0x108] sm:$0xff]
          %v1142 = vld [vmem:[#allocation2 + $0x110] sm:$0xff]
          %v1143 = vld [vmem:[#allocation2 + $0x118] sm:$0xff]
          %v1144 = vld [vmem:[#allocation2 + $0x120] sm:$0xff]
          %v1145 = vld [vmem:[#allocation2 + $0x128] sm:$0xff]
          %v1146 = vld [vmem:[#allocation2 + $0x130] sm:$0xff]
          %v1147 = vld [vmem:[#allocation2 + $0x138] sm:$0xff]
          %v1148 = vld [vmem:[#allocation2 + $0x140] sm:$0xff]
          %v1149 = vld [vmem:[#allocation2 + $0x148] sm:$0xff]
          %v1150 = vld [vmem:[#allocation2 + $0x150] sm:$0xff]
          %v1151 = vld [vmem:[#allocation2 + $0x158] sm:$0xff]
          %v1152 = vld [vmem:[#allocation2 + $0x160] sm:$0xff]
          %v1153 = vld [vmem:[#allocation2 + $0x168] sm:$0xff]
          %v1154 = vld [vmem:[#allocation2 + $0x170] sm:$0xff]
          %v1155 = vld [vmem:[#allocation2 + $0x178] sm:$0xff]
          %v1156 = vld [vmem:[#allocation2 + $0x180] sm:$0xff]
          %v1157 = vld [vmem:[#allocation2 + $0x188] sm:$0xff]
          %v1158 = vld [vmem:[#allocation2 + $0x190] sm:$0xff]
          %v1159 = vld [vmem:[#allocation2 + $0x198] sm:$0xff]
          %v1160 = vld [vmem:[#allocation2 + $0x1a0] sm:$0xff]
          %v1161 = vld [vmem:[#allocation2 + $0x1a8] sm:$0xff]
          %v1162 = vld [vmem:[#allocation2 + $0x1b0] sm:$0xff]
          %v1163 = vld [vmem:[#allocation2 + $0x1b8] sm:$0xff]
          %v1164 = vld [vmem:[#allocation2 + $0x1c0] sm:$0xff]
          %v1165 = vld [vmem:[#allocation2 + $0x1c8] sm:$0xff]
          %v1166 = vld [vmem:[#allocation2 + $0x1d0] sm:$0xff]
          %v1167 = vld [vmem:[#allocation2 + $0x1d8] sm:$0xff]
          %v1168 = vld [vmem:[#allocation2 + $0x1e0] sm:$0xff]
          %v1169 = vld [vmem:[#allocation2 + $0x1e8] sm:$0xff]
          %v1170 = vld [vmem:[#allocation2 + $0x1f0] sm:$0xff]
          %v1171 = vld [vmem:[#allocation2 + $0x1f8] sm:$0xff]
          %v1172 = vld [vmem:[%s264] sm:$0x3]
          %v1174 = vlaneseq
          %v1175 = vshrl.u32 %v1174, 7
          %v1176 = vsub.s32 0, %v1175
          %v1177 = vrot.slane %v1172, %v1176
          %v1178 = vlaneseq
          %v1179 = vshrl.u32 %v1178, 7
          %v1180 = vsub.s32 1, %v1179
          %v1181 = vrot.slane %v1172, %v1180
          %v1184 = vadd.f32 %v1108, %v1177
          %v1185 = vadd.f32 %v1109, %v1181
          %v1186 = vadd.f32 %v1110, %v1177
          %v1187 = vadd.f32 %v1111, %v1181
          %v1188 = vadd.f32 %v1112, %v1177
          %v1189 = vadd.f32 %v1113, %v1181
          %v1190 = vadd.f32 %v1114, %v1177
          %v1191 = vadd.f32 %v1115, %v1181
          %v1192 = vadd.f32 %v1116, %v1177
          %v1193 = vadd.f32 %v1117, %v1181
          %v1194 = vadd.f32 %v1118, %v1177
          %v1195 = vadd.f32 %v1119, %v1181
          %v1196 = vadd.f32 %v1120, %v1177
          %v1197 = vadd.f32 %v1121, %v1181
          %v1198 = vadd.f32 %v1122, %v1177
          %v1199 = vadd.f32 %v1123, %v1181
          %v1200 = vadd.f32 %v1124, %v1177
          %v1201 = vadd.f32 %v1125, %v1181
          %v1202 = vadd.f32 %v1126, %v1177
          %v1203 = vadd.f32 %v1127, %v1181
          %v1204 = vadd.f32 %v1128, %v1177
          %v1205 = vadd.f32 %v1129, %v1181
          %v1206 = vadd.f32 %v1130, %v1177
          %v1207 = vadd.f32 %v1131, %v1181
          %v1208 = vadd.f32 %v1132, %v1177
          %v1209 = vadd.f32 %v1133, %v1181
          %v1210 = vadd.f32 %v1134, %v1177
          %v1211 = vadd.f32 %v1135, %v1181
          %v1212 = vadd.f32 %v1136, %v1177
          %v1213 = vadd.f32 %v1137, %v1181
          %v1214 = vadd.f32 %v1138, %v1177
          %v1215 = vadd.f32 %v1139, %v1181
          %v1216 = vadd.f32 %v1140, %v1177
          %v1217 = vadd.f32 %v1141, %v1181
          %v1218 = vadd.f32 %v1142, %v1177
          %v1219 = vadd.f32 %v1143, %v1181
          %v1220 = vadd.f32 %v1144, %v1177
          %v1221 = vadd.f32 %v1145, %v1181
          %v1222 = vadd.f32 %v1146, %v1177
          %v1223 = vadd.f32 %v1147, %v1181
          %v1224 = vadd.f32 %v1148, %v1177
          %v1225 = vadd.f32 %v1149, %v1181
          %v1226 = vadd.f32 %v1150, %v1177
          %v1227 = vadd.f32 %v1151, %v1181
          %v1228 = vadd.f32 %v1152, %v1177
          %v1229 = vadd.f32 %v1153, %v1181
          %v1230 = vadd.f32 %v1154, %v1177
          %v1231 = vadd.f32 %v1155, %v1181
          %v1232 = vadd.f32 %v1156, %v1177
          %v1233 = vadd.f32 %v1157, %v1181
          %v1234 = vadd.f32 %v1158, %v1177
          %v1235 = vadd.f32 %v1159, %v1181
          %v1236 = vadd.f32 %v1160, %v1177
          %v1237 = vadd.f32 %v1161, %v1181
          %v1238 = vadd.f32 %v1162, %v1177
          %v1239 = vadd.f32 %v1163, %v1181
          %v1240 = vadd.f32 %v1164, %v1177
          %v1241 = vadd.f32 %v1165, %v1181
          %v1242 = vadd.f32 %v1166, %v1177
          %v1243 = vadd.f32 %v1167, %v1181
          %v1244 = vadd.f32 %v1168, %v1177
          %v1245 = vadd.f32 %v1169, %v1181
          %v1246 = vadd.f32 %v1170, %v1177
          %v1247 = vadd.f32 %v1171, %v1181
          %v1248 = vpack.c.bf16 %v1186, %v1184
          %v1249 = vpack.c.bf16 %v1187, %v1185
          %v1250 = vpack.c.bf16 %v1190, %v1188
          %v1251 = vpack.c.bf16 %v1191, %v1189
          %v1252 = vpack.c.bf16 %v1194, %v1192
          %v1253 = vpack.c.bf16 %v1195, %v1193
          %v1254 = vpack.c.bf16 %v1198, %v1196
          %v1255 = vpack.c.bf16 %v1199, %v1197
          %v1256 = vpack.c.bf16 %v1202, %v1200
          %v1257 = vpack.c.bf16 %v1203, %v1201
          %v1258 = vpack.c.bf16 %v1206, %v1204
          %v1259 = vpack.c.bf16 %v1207, %v1205
          %v1260 = vpack.c.bf16 %v1210, %v1208
          %v1261 = vpack.c.bf16 %v1211, %v1209
          %v1262 = vpack.c.bf16 %v1214, %v1212
          %v1263 = vpack.c.bf16 %v1215, %v1213
          %v1264 = vpack.c.bf16 %v1218, %v1216
          %v1265 = vpack.c.bf16 %v1219, %v1217
          %v1266 = vpack.c.bf16 %v1222, %v1220
          %v1267 = vpack.c.bf16 %v1223, %v1221
          %v1268 = vpack.c.bf16 %v1226, %v1224
          %v1269 = vpack.c.bf16 %v1227, %v1225
          %v1270 = vpack.c.bf16 %v1230, %v1228
          %v1271 = vpack.c.bf16 %v1231, %v1229
          %v1272 = vpack.c.bf16 %v1234, %v1232
          %v1273 = vpack.c.bf16 %v1235, %v1233
          %v1274 = vpack.c.bf16 %v1238, %v1236
          %v1275 = vpack.c.bf16 %v1239, %v1237
          %v1276 = vpack.c.bf16 %v1242, %v1240
          %v1277 = vpack.c.bf16 %v1243, %v1241
          %v1278 = vpack.c.bf16 %v1246, %v1244
          %v1279 = vpack.c.bf16 %v1247, %v1245
          %v1312 = vunpack.c.l.b16 %v1248
          %v1313 = vunpack.c.l.b16 %v1249
          %v1314 = vunpack.c.h.b16 %v1248
          %v1315 = vunpack.c.h.b16 %v1249
          %v1316 = vunpack.c.l.b16 %v1250
          %v1317 = vunpack.c.l.b16 %v1251
          %v1318 = vunpack.c.h.b16 %v1250
          %v1319 = vunpack.c.h.b16 %v1251
          %v1320 = vunpack.c.l.b16 %v1252
          %v1321 = vunpack.c.l.b16 %v1253
          %v1322 = vunpack.c.h.b16 %v1252
          %v1323 = vunpack.c.h.b16 %v1253
          %v1324 = vunpack.c.l.b16 %v1254
          %v1325 = vunpack.c.l.b16 %v1255
          %v1326 = vunpack.c.h.b16 %v1254
          %v1327 = vunpack.c.h.b16 %v1255
          %v1328 = vunpack.c.l.b16 %v1256
          %v1329 = vunpack.c.l.b16 %v1257
          %v1330 = vunpack.c.h.b16 %v1256
          %v1331 = vunpack.c.h.b16 %v1257
          %v1332 = vunpack.c.l.b16 %v1258
          %v1333 = vunpack.c.l.b16 %v1259
          %v1334 = vunpack.c.h.b16 %v1258
          %v1335 = vunpack.c.h.b16 %v1259
          %v1336 = vunpack.c.l.b16 %v1260
          %v1337 = vunpack.c.l.b16 %v1261
          %v1338 = vunpack.c.h.b16 %v1260
          %v1339 = vunpack.c.h.b16 %v1261
          %v1340 = vunpack.c.l.b16 %v1262
          %v1341 = vunpack.c.l.b16 %v1263
          %v1342 = vunpack.c.h.b16 %v1262
          %v1343 = vunpack.c.h.b16 %v1263
          %v1344 = vunpack.c.l.b16 %v1264
          %v1345 = vunpack.c.l.b16 %v1265
          %v1346 = vunpack.c.h.b16 %v1264
          %v1347 = vunpack.c.h.b16 %v1265
          %v1348 = vunpack.c.l.b16 %v1266
          %v1349 = vunpack.c.l.b16 %v1267
          %v1350 = vunpack.c.h.b16 %v1266
          %v1351 = vunpack.c.h.b16 %v1267
          %v1352 = vunpack.c.l.b16 %v1268
          %v1353 = vunpack.c.l.b16 %v1269
          %v1354 = vunpack.c.h.b16 %v1268
          %v1355 = vunpack.c.h.b16 %v1269
          %v1356 = vunpack.c.l.b16 %v1270
          %v1357 = vunpack.c.l.b16 %v1271
          %v1358 = vunpack.c.h.b16 %v1270
          %v1359 = vunpack.c.h.b16 %v1271
          %v1360 = vunpack.c.l.b16 %v1272
          %v1361 = vunpack.c.l.b16 %v1273
          %v1362 = vunpack.c.h.b16 %v1272
          %v1363 = vunpack.c.h.b16 %v1273
          %v1364 = vunpack.c.l.b16 %v1274
          %v1365 = vunpack.c.l.b16 %v1275
          %v1366 = vunpack.c.h.b16 %v1274
          %v1367 = vunpack.c.h.b16 %v1275
          %v1368 = vunpack.c.l.b16 %v1276
          %v1369 = vunpack.c.l.b16 %v1277
          %v1370 = vunpack.c.h.b16 %v1276
          %v1371 = vunpack.c.h.b16 %v1277
          %v1372 = vunpack.c.l.b16 %v1278
          %v1373 = vunpack.c.l.b16 %v1279
          %v1374 = vunpack.c.h.b16 %v1278
          %v1375 = vunpack.c.h.b16 %v1279
          %v1376 = vpack.c.b16 %v1313, %v1312
          %v1377 = vpack.c.b16 %v1315, %v1314
          %v1378 = vpack.c.b16 %v1317, %v1316
          %v1379 = vpack.c.b16 %v1319, %v1318
          %v1380 = vpack.c.b16 %v1321, %v1320
          %v1381 = vpack.c.b16 %v1323, %v1322
          %v1382 = vpack.c.b16 %v1325, %v1324
          %v1383 = vpack.c.b16 %v1327, %v1326
          %v1384 = vpack.c.b16 %v1329, %v1328
          %v1385 = vpack.c.b16 %v1331, %v1330
          %v1386 = vpack.c.b16 %v1333, %v1332
          %v1387 = vpack.c.b16 %v1335, %v1334
          %v1388 = vpack.c.b16 %v1337, %v1336
          %v1389 = vpack.c.b16 %v1339, %v1338
          %v1390 = vpack.c.b16 %v1341, %v1340
          %v1391 = vpack.c.b16 %v1343, %v1342
          %v1392 = vpack.c.b16 %v1345, %v1344
          %v1393 = vpack.c.b16 %v1347, %v1346
          %v1394 = vpack.c.b16 %v1349, %v1348
          %v1395 = vpack.c.b16 %v1351, %v1350
          %v1396 = vpack.c.b16 %v1353, %v1352
          %v1397 = vpack.c.b16 %v1355, %v1354
          %v1398 = vpack.c.b16 %v1357, %v1356
          %v1399 = vpack.c.b16 %v1359, %v1358
          %v1400 = vpack.c.b16 %v1361, %v1360
          %v1401 = vpack.c.b16 %v1363, %v1362
          %v1402 = vpack.c.b16 %v1365, %v1364
          %v1403 = vpack.c.b16 %v1367, %v1366
          %v1404 = vpack.c.b16 %v1369, %v1368
          %v1405 = vpack.c.b16 %v1371, %v1370
          %v1406 = vpack.c.b16 %v1373, %v1372
          %v1407 = vpack.c.b16 %v1375, %v1374
          %1440 = vst [vmem:[%s256] sm:$0xff] %v1376
          %1441 = vst [vmem:[%s256 + $0x8] sm:$0xff] %v1377
          %1442 = vst [vmem:[%s256 + $0x10] sm:$0xff] %v1378
          %1443 = vst [vmem:[%s256 + $0x18] sm:$0xff] %v1379
          %1444 = vst [vmem:[%s256 + $0x20] sm:$0xff] %v1380
          %1445 = vst [vmem:[%s256 + $0x28] sm:$0xff] %v1381
          %1446 = vst [vmem:[%s256 + $0x30] sm:$0xff] %v1382
          %1447 = vst [vmem:[%s256 + $0x38] sm:$0xff] %v1383
          %1448 = vst [vmem:[%s256 + $0x40] sm:$0xff] %v1384
          %1449 = vst [vmem:[%s256 + $0x48] sm:$0xff] %v1385
          %1450 = vst [vmem:[%s256 + $0x50] sm:$0xff] %v1386
          %1451 = vst [vmem:[%s256 + $0x58] sm:$0xff] %v1387
          %1452 = vst [vmem:[%s256 + $0x60] sm:$0xff] %v1388
          %1453 = vst [vmem:[%s256 + $0x68] sm:$0xff] %v1389
          %1454 = vst [vmem:[%s256 + $0x70] sm:$0xff] %v1390
          %1455 = vst [vmem:[%s256 + $0x78] sm:$0xff] %v1391
          %1456 = vst [vmem:[%s256 + $0x80] sm:$0xff] %v1392
          %1457 = vst [vmem:[%s256 + $0x88] sm:$0xff] %v1393
          %1458 = vst [vmem:[%s256 + $0x90] sm:$0xff] %v1394
          %1459 = vst [vmem:[%s256 + $0x98] sm:$0xff] %v1395
          %1460 = vst [vmem:[%s256 + $0xa0] sm:$0xff] %v1396
          %1461 = vst [vmem:[%s256 + $0xa8] sm:$0xff] %v1397
          %1462 = vst [vmem:[%s256 + $0xb0] sm:$0xff] %v1398
          %1463 = vst [vmem:[%s256 + $0xb8] sm:$0xff] %v1399
          %1464 = vst [vmem:[%s256 + $0xc0] sm:$0xff] %v1400
          %1465 = vst [vmem:[%s256 + $0xc8] sm:$0xff] %v1401
          %1466 = vst [vmem:[%s256 + $0xd0] sm:$0xff] %v1402
          %1467 = vst [vmem:[%s256 + $0xd8] sm:$0xff] %v1403
          %1468 = vst [vmem:[%s256 + $0xe0] sm:$0xff] %v1404
          %1469 = vst [vmem:[%s256 + $0xe8] sm:$0xff] %v1405
          %1470 = vst [vmem:[%s256 + $0xf0] sm:$0xff] %v1406
          %1471 = vst [vmem:[%s256 + $0xf8] sm:$0xff] %v1407
        $region48: #{tpu_custom_call.1} parent=31 // pred_fallthru
          _
        %s1472 = sand.u32 %s132, 1
        %s1473 = scalar_lea.sflag [#allocation5], %s1472
        %s1474 = sand.u32 %s132, 1
        %s1475 = smul.addr %s1474, 256
        %s1476 = scalar_lea.vmem [#allocation8], %s1475
        // Predicated region
        $region49: #{tpu_custom_call.1} parent=31 // pred_check
          %p1477 = pneg %p142
        $region50: #{tpu_custom_call.1} parent=31 // pred_check_branch
          %1479 = sbr.rel (%p1477) target = $region52
        $region51: #{tpu_custom_call.1} parent=31 // pred_region
          %s1480 = smul.u32 32, %s26
          %s1481 = smul.u32 2, %s27
          %s1483 = ssub.s32 4096, 4096
          %1484 = vsyncadd %s1473, %s1483
          %s1485 = smul.addr %s1480, 6
          %s1486 = sadd.s32 %s1481, %s1485
          %s1487 = smul.addr %s1486, 64
          %s1488 = scalar_lea.hbm %s3, %s1487
          %s1489 = sshll.u32 %s1476, 4
          %s1490 = int_to_ptr.vmem [resolvable:$true] %s1489
          %1495 = dma.vmem_to_hbm [thread:$0]  %s1490, 4096, %s1488, %s1473, 128, 384, 8
        $region52: #{tpu_custom_call.1} parent=31 // pred_fallthru
          _
      $region32: #{tpu_custom_call.1} parent=5 // pred_fallthru
        _
      %p1496 = scmp.le.s32.totalorder 2, %s16
      // Predicated region
      $region53: #{tpu_custom_call.1} parent=5 // pred_check
        %p1497 = pneg %p1496
      $region54: #{tpu_custom_call.1} parent=5 // pred_check_branch
        %1499 = sbr.rel (%p1497) target = $region56
      $region55: #{tpu_custom_call.1} parent=5 // pred_region
        %s1500 = ssub.s32 %s16, 2
        // Predicated region
        $region57: #{tpu_custom_call.1} parent=55 // pred_check
          %p1501 = pneg %p148
        $region58: #{tpu_custom_call.1} parent=55 // pred_check_branch
          %1503 = sbr.rel (%p1501) target = $region60
        $region59: #{tpu_custom_call.1} parent=55 // pred_region
          %s1504 = sand.u32 %s133, 1
          %s1505 = scalar_lea.sflag [#allocation5], %s1504
          %s1506 = sand.u32 %s133, 1
          %s1507 = smul.addr %s1506, 256
          %s1508 = scalar_lea.vmem [#allocation8], %s1507
          %1509 = dma.done %s1505, 4096
        $region60: #{tpu_custom_call.1} parent=55 // pred_fallthru
          _
      $region56: #{tpu_custom_call.1} parent=5 // pred_fallthru
        _
    $region6: #{tpu_custom_call.1} parent=1 // loop_footer
      %s20 = sadd.s32 1, %s16
    $region7: #{tpu_custom_call.1} parent=1 // loop_footer_branch
      %15 = sbr.rel target = $region3
    $region8: #{tpu_custom_call.1} parent=1 // loop_exit
      _
    %1510 = vsyncpa [#allocation4], 1
    %s1511 = scalar_lea.sflag [#allocation4], 1
    %1512 = vsyncpa %s1511, 1
    %1513 = vsyncpa [#allocation7], 1
    %s1514 = scalar_lea.sflag [#allocation7], 1
    %1515 = vsyncpa %s1514, 1
    %1516 = vsyncpa [#allocation5], 1
    %s1517 = scalar_lea.sflag [#allocation5], 1
    %1518 = vsyncpa %s1517, 1

</llo_original>
